<compile_context>
chip_gen: v6e
topology: v6e:2x2x1
jax: 0.10.0
libtpu: 0.0.40
codegen_flags: <defaults>
</compile_context>

<pallas_src>
import numpy as np
import jax
import jax.numpy as jnp
from jax import lax
from jax.experimental import pallas as pl
from jax.experimental.pallas import tpu as pltpu

# Small, module-consistent shapes: batch=2, seq=8, n_features=4, hidden=32, k=4
B, T, F, H, K = 2, 8, 4, 32, 4

# Row offsets inside the packed (112, 4H=128) weight slab (8-row aligned so
# in-kernel slices never straddle an (8,128) tile boundary unaligned).
R_ENC_WIH = 0     # rows  0:4              enc W_ih           (F, 4H)
R_ENC_WHH = 8     # rows  8:40             enc W_hh           (H, 4H)
R_W_EFF   = 40    # rows 40:72             dec folded W_eff   (H, 4H)
R_ENC_B   = 72    # row  72                enc bias           (1, 4H)
R_B_EFF   = 73    # row  73                dec folded bias    (1, 4H)
R_B_OUT   = 74    # row  74, lanes 0:F     hidden2output bias (1, F)
R_MISC    = 80    # rows 80:112, lanes 0:F = W_out (H,F); lanes F:F+K = proto^T (H,K)
SLAB_ROWS = 112


def lstmed_kernel(x_ref,        # (B, T*F)  batch-major flattened input
                  w_ref,        # (112, 4H) packed weight slab
                  out_ref,      # (B*T, F)  batch-major reconstruction
                  c_last_ref,   # (B, H)
                  a_ref,        # (B, K)
                  h_scratch):   # VMEM (B*T, H), fully written before read
    f32 = jnp.float32
    DEFP = lax.Precision.DEFAULT  # single-pass MXU path on the recurrence dots

    # ---- unpack weights: static, tile-aligned slices of the one slab --------
    enc_wih = w_ref[R_ENC_WIH:R_ENC_WIH + F, :]            # (F, 4H)
    enc_whh = w_ref[R_ENC_WHH:R_ENC_WHH + H, :]            # (H, 4H)
    w_eff   = w_ref[R_W_EFF:R_W_EFF + H, :]                # (H, 4H)
    enc_b_b = jnp.broadcast_to(w_ref[R_ENC_B:R_ENC_B + 1, :], (B, 4 * H))
    b_eff_b = jnp.broadcast_to(w_ref[R_B_EFF:R_B_EFF + 1, :], (B, 4 * H))
    b_out   = w_ref[R_B_OUT:R_B_OUT + 1, 0:F]              # (1, F)
    w_out   = w_ref[R_MISC:R_MISC + H, 0:F]                # (H, F)
    proto_t = w_ref[R_MISC:R_MISC + H, F:F + K]            # (H, K)

    x_all = x_ref[...]                                     # (B, T*F)

    # ---- gate nonlinearity: ONE EUP pass over the (B,4H) gates vreg ---------
    # gate order along 4H: i, f, g, o.  sigmoid(x) = 0.5*(tanh(x/2)+1), so a
    # single tanh(gates * pre_scale) with pre_scale = 1 on the g-range and 0.5
    # elsewhere, followed by a VPU select / affine fix-up.
    lane = lax.broadcasted_iota(jnp.int32, (B, 4 * H), 1)
    g_mask = (lane >= 2 * H) & (lane < 3 * H)
    pre_scale = jnp.where(g_mask, jnp.float32(1.0), jnp.float32(0.5))  # hoisted

    def cell_from_gates(gates, c):
        th = jnp.tanh(gates * pre_scale)                   # single EUP pass
        act = jnp.where(g_mask, th, 0.5 * th + 0.5)        # sigmoid via tanh
        i_g = act[:, 0 * H:1 * H]
        f_g = act[:, 1 * H:2 * H]
        g_g = act[:, 2 * H:3 * H]
        o_g = act[:, 3 * H:4 * H]
        c_new = f_g * c + i_g * g_g
        h_new = o_g * jnp.tanh(c_new)
        return h_new, c_new

    # ---- encoder: fully unrolled; per-step x projection is off the h-chain --
    gates0 = jnp.dot(x_all[:, 0:F], enc_wih, preferred_element_type=f32) + enc_b_b
    h, c = cell_from_gates(gates0, jnp.zeros((B, H), f32))
    for t in range(1, T):
        x_t = x_all[:, t * F:(t + 1) * F]                  # (B, F) lane slice
        gates = (jnp.dot(x_t, enc_wih, preferred_element_type=f32)
                 + jnp.dot(h, enc_whh, precision=DEFP, preferred_element_type=f32)
                 + enc_b_b)
        h, c = cell_from_gates(gates, c)
    h_enc, c_enc = h, c
    c_last_ref[...] = c_enc                                # enc_hidden[1][-1]

    # ---- decoder: reversed time, eval-mode self-feedback folded offline -----
    # gates = h @ (dec_Whh + W_out@dec_Wih) + (dec_b + b_out@dec_Wih)
    # TODO(synk): training-mode branch (decoder teacher-forced with
    # ts_batch[:, i]) is not emitted; this is the inference path of forward().
    h, c = h_enc, c_enc
    for j in range(T):                                     # i = T-1 ... 0
        i = T - 1 - j
        for b in range(B):                                 # stage h, batch-major rows
            h_scratch[b * T + i:b * T + i + 1, :] = h[b:b + 1, :]
        gates = (jnp.dot(h, w_eff, precision=DEFP, preferred_element_type=f32)
                 + b_eff_b)
        h, c = cell_from_gates(gates, c)

    # Deferred output projection: one matmul + one store for all timesteps,
    # batch-major so the host-side (B,T,F) view is a free contiguous reshape.
    out_ref[...] = (jnp.dot(h_scratch[...], w_out, preferred_element_type=f32)
                    + b_out)                               # (B*T, F)

    # ---- prototype layer: a = exp(-||h - p||^2) via MXU expansion -----------
    p_sq = jnp.sum(proto_t * proto_t, axis=0, keepdims=True)        # (1, K)
    h_sq = jnp.sum(h_enc * h_enc, axis=1, keepdims=True)            # (B, 1)
    hp = jnp.dot(h_enc, proto_t, preferred_element_type=f32)        # (B, K)
    sq_dist = jnp.maximum(h_sq - 2.0 * hp + p_sq, 0.0)              # clamp cancellation
    a_ref[...] = jnp.exp(-sq_dist)


def lstmed_forward(ts_batch_btf, w_slab):
    """ts_batch_btf: (B,T,F) float32; w_slab: packed (112,128) weights.
    Returns (output (B,T,F), c_last (B,H), a (B,K))."""
    # Contiguous reshape only (bitcast) — no transpose HLOs around the kernel.
    x2 = ts_batch_btf.astype(jnp.float32).reshape(B, T * F)
    vmem = lambda: pl.BlockSpec(memory_space=pltpu.MemorySpace.VMEM)
    out2, c_last, a = pl.pallas_call(
        lstmed_kernel,
        out_shape=(jax.ShapeDtypeStruct((B * T, F), jnp.float32),
                   jax.ShapeDtypeStruct((B, H), jnp.float32),
                   jax.ShapeDtypeStruct((B, K), jnp.float32)),
        in_specs=[vmem(), vmem()],
        out_specs=(vmem(), vmem(), vmem()),
        scratch_shapes=[pltpu.VMEM((B * T, H), jnp.float32)],
    )(x2, w_slab)
    return out2.reshape(B, T, F), c_last, a


def pack_params(params):
    """One-time offline param prep: fold the decoder self-feedback, transpose
    the prototype, and pack every weight into one lane-dense (112,128) f32
    slab (single weight DMA, 8-row-aligned sub-blocks)."""
    (enc_wih, enc_whh, enc_b, dec_wih, dec_whh, dec_b, w_out, b_out, proto) = [
        np.asarray(p, np.float64) for p in params]
    w_eff = dec_whh + w_out @ dec_wih        # (H, 4H): folds y = h@W_out + b_out feedback
    b_eff = dec_b + b_out @ dec_wih          # (1, 4H)
    slab = np.zeros((SLAB_ROWS, 4 * H), np.float32)
    slab[R_ENC_WIH:R_ENC_WIH + F, :] = enc_wih
    slab[R_ENC_WHH:R_ENC_WHH + H, :] = enc_whh
    slab[R_W_EFF:R_W_EFF + H, :] = w_eff
    slab[R_ENC_B, :] = enc_b[0]
    slab[R_B_EFF, :] = b_eff[0]
    slab[R_B_OUT, 0:F] = b_out[0]
    slab[R_MISC:R_MISC + H, 0:F] = w_out
    slab[R_MISC:R_MISC + H, F:F + K] = proto.T
    return jnp.asarray(slab)


def reference_forward(ts_batch_btf, params):
    """Pure-JAX reference mirroring the PyTorch eval-mode forward."""
    (enc_wih, enc_whh, enc_b, dec_wih, dec_whh, dec_b, w_out, b_out, proto) = params
    hp = lax.Precision.HIGHEST

    def cell(xt, h, c, wi, wh, b):
        g = jnp.dot(xt, wi, precision=hp) + jnp.dot(h, wh, precision=hp) + b
        i = jax.nn.sigmoid(g[:, :H])
        f = jax.nn.sigmoid(g[:, H:2 * H])
        gg = jnp.tanh(g[:, 2 * H:3 * H])
        o = jax.nn.sigmoid(g[:, 3 * H:])
        c = f * c + i * gg
        return o * jnp.tanh(c), c

    h = jnp.zeros((B, H), jnp.float32)
    c = jnp.zeros((B, H), jnp.float32)
    for t in range(T):
        h, c = cell(ts_batch_btf[:, t], h, c, enc_wih, enc_whh, enc_b)
    h_enc, c_enc = h, c

    hd, cd = h_enc, c_enc
    cols = [None] * T
    for i in reversed(range(T)):
        y = jnp.dot(hd, w_out, precision=hp) + b_out
        cols[i] = y
        hd, cd = cell(y, hd, cd, dec_wih, dec_whh, dec_b)
    out = jnp.stack(cols, axis=1)

    d = h_enc[:, None, :] - proto[None, :, :]
    a = jnp.exp(-jnp.sum(d * d, axis=-1))
    return out, c_enc, a


def make_params(key):
    """Deterministic synthetic weights (PyTorch-style uniform(-1/sqrt(H), 1/sqrt(H)),
    prototype ~ uniform(0, 1)). LSTM i/h biases are folded into one bias vector."""
    ks = jax.random.split(key, 9)
    s = 1.0 / np.sqrt(H)
    u = lambda k, shape: jax.random.uniform(k, shape, jnp.float32, minval=-s, maxval=s)
    enc_wih = u(ks[0], (F, 4 * H))
    enc_whh = u(ks[1], (H, 4 * H))
    enc_b = u(ks[2], (1, 4 * H))
    dec_wih = u(ks[3], (F, 4 * H))
    dec_whh = u(ks[4], (H, 4 * H))
    dec_b = u(ks[5], (1, 4 * H))
    w_out = u(ks[6], (H, F))
    b_out = u(ks[7], (1, F))
    proto = jax.random.uniform(ks[8], (K, H), jnp.float32, minval=0.0, maxval=1.0)
    return (enc_wih, enc_whh, enc_b, dec_wih, dec_whh, dec_b, w_out, b_out, proto)


if __name__ == "__main__":
    root = jax.random.PRNGKey(0)
    k_x, k_p = jax.random.split(root)
    ts_batch = jax.random.normal(k_x, (B, T, F), jnp.float32)
    params = make_params(k_p)
    w_slab = pack_params(params)            # one-time offline param prep

    fwd = jax.jit(lstmed_forward)
    out, c_last, a = fwd(ts_batch, w_slab)
    jax.block_until_ready((out, c_last, a))

    out_ref, c_ref, a_ref = reference_forward(ts_batch, params)
    np.testing.assert_allclose(np.asarray(out), np.asarray(out_ref), rtol=2e-3, atol=2e-3)
    np.testing.assert_allclose(np.asarray(c_last), np.asarray(c_ref), rtol=2e-3, atol=2e-3)
    np.testing.assert_allclose(np.asarray(a), np.asarray(a_ref), rtol=2e-3, atol=2e-3)

    print("KERNEL_OK")
</pallas_src>

<mosaic_0001>
module attributes {stable_mosaic.version = 11 : i64} {
  func.func @lstmed_kernel(%arg0: memref<2x32xf32, #tpu.memory_space<vmem>>, %arg1: memref<112x128xf32, #tpu.memory_space<vmem>>, %arg2: memref<16x4xf32, #tpu.memory_space<vmem>>, %arg3: memref<2x32xf32, #tpu.memory_space<vmem>>, %arg4: memref<2x4xf32, #tpu.memory_space<vmem>>, %arg5: memref<16x32xf32, #tpu.memory_space<vmem>>) attributes {dimension_semantics = [], scalar_prefetch = 0 : i64, scratch_operands = 1 : i64, tpu.core_type = #tpu.core_type<tc>} {
    %c0 = arith.constant 0 : index
    %c0_0 = arith.constant 0 : index
    %0 = vector.load %arg1[%c0, %c0_0] : memref<112x128xf32, #tpu.memory_space<vmem>>, vector<4x128xf32>
    %c8 = arith.constant 8 : index
    %c0_1 = arith.constant 0 : index
    %1 = vector.load %arg1[%c8, %c0_1] : memref<112x128xf32, #tpu.memory_space<vmem>>, vector<32x128xf32>
    %c40 = arith.constant 40 : index
    %c0_2 = arith.constant 0 : index
    %2 = vector.load %arg1[%c40, %c0_2] : memref<112x128xf32, #tpu.memory_space<vmem>>, vector<32x128xf32>
    %c72 = arith.constant 72 : index
    %c0_3 = arith.constant 0 : index
    %3 = vector.load %arg1[%c72, %c0_3] : memref<112x128xf32, #tpu.memory_space<vmem>>, vector<1x128xf32>
    %4 = vector.shape_cast %3 : vector<1x128xf32> to vector<1x128xf32>
    %5 = vector.broadcast %4 : vector<1x128xf32> to vector<2x128xf32>
    %c73 = arith.constant 73 : index
    %c0_4 = arith.constant 0 : index
    %6 = vector.load %arg1[%c73, %c0_4] : memref<112x128xf32, #tpu.memory_space<vmem>>, vector<1x128xf32>
    %7 = vector.shape_cast %6 : vector<1x128xf32> to vector<1x128xf32>
    %8 = vector.broadcast %7 : vector<1x128xf32> to vector<2x128xf32>
    %c74 = arith.constant 74 : index
    %c0_5 = arith.constant 0 : index
    %9 = vector.load %arg1[%c74, %c0_5] : memref<112x128xf32, #tpu.memory_space<vmem>>, vector<1x4xf32>
    %c80 = arith.constant 80 : index
    %c0_6 = arith.constant 0 : index
    %10 = vector.load %arg1[%c80, %c0_6] : memref<112x128xf32, #tpu.memory_space<vmem>>, vector<32x4xf32>
    %c80_7 = arith.constant 80 : index
    %c4 = arith.constant 4 : index
    %11 = vector.load %arg1[%c80_7, %c4] : memref<112x128xf32, #tpu.memory_space<vmem>>, vector<32x4xf32>
    %c0_8 = arith.constant 0 : index
    %c0_9 = arith.constant 0 : index
    %12 = vector.load %arg0[%c0_8, %c0_9] : memref<2x32xf32, #tpu.memory_space<vmem>>, vector<2x32xf32>
    %13 = tpu.iota {dimensions = array<i32: 1>} : vector<2x128xi32>
    %c64_i32 = arith.constant 64 : i32
    %14 = vector.broadcast %c64_i32 : i32 to vector<2x128xi32>
    %15 = arith.cmpi sge, %13, %14 : vector<2x128xi32>
    %c96_i32 = arith.constant 96 : i32
    %16 = vector.broadcast %c96_i32 : i32 to vector<2x128xi32>
    %17 = arith.cmpi slt, %13, %16 : vector<2x128xi32>
    %18 = arith.andi %15, %17 : vector<2x128xi1>
    %cst = arith.constant 1.000000e+00 : f32
    %cst_10 = arith.constant 5.000000e-01 : f32
    %19 = vector.broadcast %cst : f32 to vector<2x128xf32>
    %20 = vector.broadcast %cst_10 : f32 to vector<2x128xf32>
    %21 = arith.select %18, %19, %20 : vector<2x128xi1>, vector<2x128xf32>
    %22 = vector.extract_strided_slice %12 {offsets = [0, 0], sizes = [2, 4], strides = [1, 1]} : vector<2x32xf32> to vector<2x4xf32>
    %cst_11 = arith.constant dense<0.000000e+00> : vector<2x128xf32>
    %23 = tpu.matmul %22, %0, %cst_11 {dimension_numbers = #tpu.dot_dimension_numbers<[1], [0], [0], [1], [0, 0, 1, 1], [], []>} : vector<2x4xf32>, vector<4x128xf32>, vector<2x128xf32> -> vector<2x128xf32>
    %24 = arith.addf %23, %5 : vector<2x128xf32>
    %cst_12 = arith.constant 0.000000e+00 : f32
    %25 = vector.broadcast %cst_12 : f32 to vector<2x32xf32>
    %26 = arith.mulf %24, %21 : vector<2x128xf32>
    %27 = math.tanh %26 : vector<2x128xf32>
    %cst_13 = arith.constant 5.000000e-01 : f32
    %28 = vector.broadcast %cst_13 : f32 to vector<2x128xf32>
    %29 = arith.mulf %28, %27 : vector<2x128xf32>
    %cst_14 = arith.constant 5.000000e-01 : f32
    %30 = vector.broadcast %cst_14 : f32 to vector<2x128xf32>
    %31 = arith.addf %29, %30 : vector<2x128xf32>
    %32 = arith.select %18, %27, %31 : vector<2x128xi1>, vector<2x128xf32>
    %33 = vector.extract_strided_slice %32 {offsets = [0, 0], sizes = [2, 32], strides = [1, 1]} : vector<2x128xf32> to vector<2x32xf32>
    %34 = vector.extract_strided_slice %32 {offsets = [0, 32], sizes = [2, 32], strides = [1, 1]} : vector<2x128xf32> to vector<2x32xf32>
    %35 = vector.extract_strided_slice %32 {offsets = [0, 64], sizes = [2, 32], strides = [1, 1]} : vector<2x128xf32> to vector<2x32xf32>
    %36 = vector.extract_strided_slice %32 {offsets = [0, 96], sizes = [2, 32], strides = [1, 1]} : vector<2x128xf32> to vector<2x32xf32>
    %37 = arith.mulf %34, %25 : vector<2x32xf32>
    %38 = arith.mulf %33, %35 : vector<2x32xf32>
    %39 = arith.addf %37, %38 : vector<2x32xf32>
    %40 = math.tanh %39 : vector<2x32xf32>
    %41 = arith.mulf %36, %40 : vector<2x32xf32>
    %42 = vector.extract_strided_slice %12 {offsets = [0, 4], sizes = [2, 4], strides = [1, 1]} : vector<2x32xf32> to vector<2x4xf32>
    %cst_15 = arith.constant dense<0.000000e+00> : vector<2x128xf32>
    %43 = tpu.matmul %42, %0, %cst_15 {dimension_numbers = #tpu.dot_dimension_numbers<[1], [0], [0], [1], [0, 0, 1, 1], [], []>} : vector<2x4xf32>, vector<4x128xf32>, vector<2x128xf32> -> vector<2x128xf32>
    %cst_16 = arith.constant dense<0.000000e+00> : vector<2x128xf32>
    %44 = tpu.matmul %41, %1, %cst_16 {dimension_numbers = #tpu.dot_dimension_numbers<[1], [0], [0], [1], [0, 0, 1, 1], [], []>} : vector<2x32xf32>, vector<32x128xf32>, vector<2x128xf32> -> vector<2x128xf32>
    %45 = arith.addf %43, %44 : vector<2x128xf32>
    %46 = arith.addf %45, %5 : vector<2x128xf32>
    %47 = arith.mulf %46, %21 : vector<2x128xf32>
    %48 = math.tanh %47 : vector<2x128xf32>
    %cst_17 = arith.constant 5.000000e-01 : f32
    %49 = vector.broadcast %cst_17 : f32 to vector<2x128xf32>
    %50 = arith.mulf %49, %48 : vector<2x128xf32>
    %cst_18 = arith.constant 5.000000e-01 : f32
    %51 = vector.broadcast %cst_18 : f32 to vector<2x128xf32>
    %52 = arith.addf %50, %51 : vector<2x128xf32>
    %53 = arith.select %18, %48, %52 : vector<2x128xi1>, vector<2x128xf32>
    %54 = vector.extract_strided_slice %53 {offsets = [0, 0], sizes = [2, 32], strides = [1, 1]} : vector<2x128xf32> to vector<2x32xf32>
    %55 = vector.extract_strided_slice %53 {offsets = [0, 32], sizes = [2, 32], strides = [1, 1]} : vector<2x128xf32> to vector<2x32xf32>
    %56 = vector.extract_strided_slice %53 {offsets = [0, 64], sizes = [2, 32], strides = [1, 1]} : vector<2x128xf32> to vector<2x32xf32>
    %57 = vector.extract_strided_slice %53 {offsets = [0, 96], sizes = [2, 32], strides = [1, 1]} : vector<2x128xf32> to vector<2x32xf32>
    %58 = arith.mulf %55, %39 : vector<2x32xf32>
    %59 = arith.mulf %54, %56 : vector<2x32xf32>
    %60 = arith.addf %58, %59 : vector<2x32xf32>
    %61 = math.tanh %60 : vector<2x32xf32>
    %62 = arith.mulf %57, %61 : vector<2x32xf32>
    %63 = vector.extract_strided_slice %12 {offsets = [0, 8], sizes = [2, 4], strides = [1, 1]} : vector<2x32xf32> to vector<2x4xf32>
    %cst_19 = arith.constant dense<0.000000e+00> : vector<2x128xf32>
    %64 = tpu.matmul %63, %0, %cst_19 {dimension_numbers = #tpu.dot_dimension_numbers<[1], [0], [0], [1], [0, 0, 1, 1], [], []>} : vector<2x4xf32>, vector<4x128xf32>, vector<2x128xf32> -> vector<2x128xf32>
    %cst_20 = arith.constant dense<0.000000e+00> : vector<2x128xf32>
    %65 = tpu.matmul %62, %1, %cst_20 {dimension_numbers = #tpu.dot_dimension_numbers<[1], [0], [0], [1], [0, 0, 1, 1], [], []>} : vector<2x32xf32>, vector<32x128xf32>, vector<2x128xf32> -> vector<2x128xf32>
    %66 = arith.addf %64, %65 : vector<2x128xf32>
    %67 = arith.addf %66, %5 : vector<2x128xf32>
    %68 = arith.mulf %67, %21 : vector<2x128xf32>
    %69 = math.tanh %68 : vector<2x128xf32>
    %cst_21 = arith.constant 5.000000e-01 : f32
    %70 = vector.broadcast %cst_21 : f32 to vector<2x128xf32>
    %71 = arith.mulf %70, %69 : vector<2x128xf32>
    %cst_22 = arith.constant 5.000000e-01 : f32
    %72 = vector.broadcast %cst_22 : f32 to vector<2x128xf32>
    %73 = arith.addf %71, %72 : vector<2x128xf32>
    %74 = arith.select %18, %69, %73 : vector<2x128xi1>, vector<2x128xf32>
    %75 = vector.extract_strided_slice %74 {offsets = [0, 0], sizes = [2, 32], strides = [1, 1]} : vector<2x128xf32> to vector<2x32xf32>
    %76 = vector.extract_strided_slice %74 {offsets = [0, 32], sizes = [2, 32], strides = [1, 1]} : vector<2x128xf32> to vector<2x32xf32>
    %77 = vector.extract_strided_slice %74 {offsets = [0, 64], sizes = [2, 32], strides = [1, 1]} : vector<2x128xf32> to vector<2x32xf32>
    %78 = vector.extract_strided_slice %74 {offsets = [0, 96], sizes = [2, 32], strides = [1, 1]} : vector<2x128xf32> to vector<2x32xf32>
    %79 = arith.mulf %76, %60 : vector<2x32xf32>
    %80 = arith.mulf %75, %77 : vector<2x32xf32>
    %81 = arith.addf %79, %80 : vector<2x32xf32>
    %82 = math.tanh %81 : vector<2x32xf32>
    %83 = arith.mulf %78, %82 : vector<2x32xf32>
    %84 = vector.extract_strided_slice %12 {offsets = [0, 12], sizes = [2, 4], strides = [1, 1]} : vector<2x32xf32> to vector<2x4xf32>
    %cst_23 = arith.constant dense<0.000000e+00> : vector<2x128xf32>
    %85 = tpu.matmul %84, %0, %cst_23 {dimension_numbers = #tpu.dot_dimension_numbers<[1], [0], [0], [1], [0, 0, 1, 1], [], []>} : vector<2x4xf32>, vector<4x128xf32>, vector<2x128xf32> -> vector<2x128xf32>
    %cst_24 = arith.constant dense<0.000000e+00> : vector<2x128xf32>
    %86 = tpu.matmul %83, %1, %cst_24 {dimension_numbers = #tpu.dot_dimension_numbers<[1], [0], [0], [1], [0, 0, 1, 1], [], []>} : vector<2x32xf32>, vector<32x128xf32>, vector<2x128xf32> -> vector<2x128xf32>
    %87 = arith.addf %85, %86 : vector<2x128xf32>
    %88 = arith.addf %87, %5 : vector<2x128xf32>
    %89 = arith.mulf %88, %21 : vector<2x128xf32>
    %90 = math.tanh %89 : vector<2x128xf32>
    %cst_25 = arith.constant 5.000000e-01 : f32
    %91 = vector.broadcast %cst_25 : f32 to vector<2x128xf32>
    %92 = arith.mulf %91, %90 : vector<2x128xf32>
    %cst_26 = arith.constant 5.000000e-01 : f32
    %93 = vector.broadcast %cst_26 : f32 to vector<2x128xf32>
    %94 = arith.addf %92, %93 : vector<2x128xf32>
    %95 = arith.select %18, %90, %94 : vector<2x128xi1>, vector<2x128xf32>
    %96 = vector.extract_strided_slice %95 {offsets = [0, 0], sizes = [2, 32], strides = [1, 1]} : vector<2x128xf32> to vector<2x32xf32>
    %97 = vector.extract_strided_slice %95 {offsets = [0, 32], sizes = [2, 32], strides = [1, 1]} : vector<2x128xf32> to vector<2x32xf32>
    %98 = vector.extract_strided_slice %95 {offsets = [0, 64], sizes = [2, 32], strides = [1, 1]} : vector<2x128xf32> to vector<2x32xf32>
    %99 = vector.extract_strided_slice %95 {offsets = [0, 96], sizes = [2, 32], strides = [1, 1]} : vector<2x128xf32> to vector<2x32xf32>
    %100 = arith.mulf %97, %81 : vector<2x32xf32>
    %101 = arith.mulf %96, %98 : vector<2x32xf32>
    %102 = arith.addf %100, %101 : vector<2x32xf32>
    %103 = math.tanh %102 : vector<2x32xf32>
    %104 = arith.mulf %99, %103 : vector<2x32xf32>
    %105 = vector.extract_strided_slice %12 {offsets = [0, 16], sizes = [2, 4], strides = [1, 1]} : vector<2x32xf32> to vector<2x4xf32>
    %cst_27 = arith.constant dense<0.000000e+00> : vector<2x128xf32>
    %106 = tpu.matmul %105, %0, %cst_27 {dimension_numbers = #tpu.dot_dimension_numbers<[1], [0], [0], [1], [0, 0, 1, 1], [], []>} : vector<2x4xf32>, vector<4x128xf32>, vector<2x128xf32> -> vector<2x128xf32>
    %cst_28 = arith.constant dense<0.000000e+00> : vector<2x128xf32>
    %107 = tpu.matmul %104, %1, %cst_28 {dimension_numbers = #tpu.dot_dimension_numbers<[1], [0], [0], [1], [0, 0, 1, 1], [], []>} : vector<2x32xf32>, vector<32x128xf32>, vector<2x128xf32> -> vector<2x128xf32>
    %108 = arith.addf %106, %107 : vector<2x128xf32>
    %109 = arith.addf %108, %5 : vector<2x128xf32>
    %110 = arith.mulf %109, %21 : vector<2x128xf32>
    %111 = math.tanh %110 : vector<2x128xf32>
    %cst_29 = arith.constant 5.000000e-01 : f32
    %112 = vector.broadcast %cst_29 : f32 to vector<2x128xf32>
    %113 = arith.mulf %112, %111 : vector<2x128xf32>
    %cst_30 = arith.constant 5.000000e-01 : f32
    %114 = vector.broadcast %cst_30 : f32 to vector<2x128xf32>
    %115 = arith.addf %113, %114 : vector<2x128xf32>
    %116 = arith.select %18, %111, %115 : vector<2x128xi1>, vector<2x128xf32>
    %117 = vector.extract_strided_slice %116 {offsets = [0, 0], sizes = [2, 32], strides = [1, 1]} : vector<2x128xf32> to vector<2x32xf32>
    %118 = vector.extract_strided_slice %116 {offsets = [0, 32], sizes = [2, 32], strides = [1, 1]} : vector<2x128xf32> to vector<2x32xf32>
    %119 = vector.extract_strided_slice %116 {offsets = [0, 64], sizes = [2, 32], strides = [1, 1]} : vector<2x128xf32> to vector<2x32xf32>
    %120 = vector.extract_strided_slice %116 {offsets = [0, 96], sizes = [2, 32], strides = [1, 1]} : vector<2x128xf32> to vector<2x32xf32>
    %121 = arith.mulf %118, %102 : vector<2x32xf32>
    %122 = arith.mulf %117, %119 : vector<2x32xf32>
    %123 = arith.addf %121, %122 : vector<2x32xf32>
    %124 = math.tanh %123 : vector<2x32xf32>
    %125 = arith.mulf %120, %124 : vector<2x32xf32>
    %126 = vector.extract_strided_slice %12 {offsets = [0, 20], sizes = [2, 4], strides = [1, 1]} : vector<2x32xf32> to vector<2x4xf32>
    %cst_31 = arith.constant dense<0.000000e+00> : vector<2x128xf32>
    %127 = tpu.matmul %126, %0, %cst_31 {dimension_numbers = #tpu.dot_dimension_numbers<[1], [0], [0], [1], [0, 0, 1, 1], [], []>} : vector<2x4xf32>, vector<4x128xf32>, vector<2x128xf32> -> vector<2x128xf32>
    %cst_32 = arith.constant dense<0.000000e+00> : vector<2x128xf32>
    %128 = tpu.matmul %125, %1, %cst_32 {dimension_numbers = #tpu.dot_dimension_numbers<[1], [0], [0], [1], [0, 0, 1, 1], [], []>} : vector<2x32xf32>, vector<32x128xf32>, vector<2x128xf32> -> vector<2x128xf32>
    %129 = arith.addf %127, %128 : vector<2x128xf32>
    %130 = arith.addf %129, %5 : vector<2x128xf32>
    %131 = arith.mulf %130, %21 : vector<2x128xf32>
    %132 = math.tanh %131 : vector<2x128xf32>
    %cst_33 = arith.constant 5.000000e-01 : f32
    %133 = vector.broadcast %cst_33 : f32 to vector<2x128xf32>
    %134 = arith.mulf %133, %132 : vector<2x128xf32>
    %cst_34 = arith.constant 5.000000e-01 : f32
    %135 = vector.broadcast %cst_34 : f32 to vector<2x128xf32>
    %136 = arith.addf %134, %135 : vector<2x128xf32>
    %137 = arith.select %18, %132, %136 : vector<2x128xi1>, vector<2x128xf32>
    %138 = vector.extract_strided_slice %137 {offsets = [0, 0], sizes = [2, 32], strides = [1, 1]} : vector<2x128xf32> to vector<2x32xf32>
    %139 = vector.extract_strided_slice %137 {offsets = [0, 32], sizes = [2, 32], strides = [1, 1]} : vector<2x128xf32> to vector<2x32xf32>
    %140 = vector.extract_strided_slice %137 {offsets = [0, 64], sizes = [2, 32], strides = [1, 1]} : vector<2x128xf32> to vector<2x32xf32>
    %141 = vector.extract_strided_slice %137 {offsets = [0, 96], sizes = [2, 32], strides = [1, 1]} : vector<2x128xf32> to vector<2x32xf32>
    %142 = arith.mulf %139, %123 : vector<2x32xf32>
    %143 = arith.mulf %138, %140 : vector<2x32xf32>
    %144 = arith.addf %142, %143 : vector<2x32xf32>
    %145 = math.tanh %144 : vector<2x32xf32>
    %146 = arith.mulf %141, %145 : vector<2x32xf32>
    %147 = vector.extract_strided_slice %12 {offsets = [0, 24], sizes = [2, 4], strides = [1, 1]} : vector<2x32xf32> to vector<2x4xf32>
    %cst_35 = arith.constant dense<0.000000e+00> : vector<2x128xf32>
    %148 = tpu.matmul %147, %0, %cst_35 {dimension_numbers = #tpu.dot_dimension_numbers<[1], [0], [0], [1], [0, 0, 1, 1], [], []>} : vector<2x4xf32>, vector<4x128xf32>, vector<2x128xf32> -> vector<2x128xf32>
    %cst_36 = arith.constant dense<0.000000e+00> : vector<2x128xf32>
    %149 = tpu.matmul %146, %1, %cst_36 {dimension_numbers = #tpu.dot_dimension_numbers<[1], [0], [0], [1], [0, 0, 1, 1], [], []>} : vector<2x32xf32>, vector<32x128xf32>, vector<2x128xf32> -> vector<2x128xf32>
    %150 = arith.addf %148, %149 : vector<2x128xf32>
    %151 = arith.addf %150, %5 : vector<2x128xf32>
    %152 = arith.mulf %151, %21 : vector<2x128xf32>
    %153 = math.tanh %152 : vector<2x128xf32>
    %cst_37 = arith.constant 5.000000e-01 : f32
    %154 = vector.broadcast %cst_37 : f32 to vector<2x128xf32>
    %155 = arith.mulf %154, %153 : vector<2x128xf32>
    %cst_38 = arith.constant 5.000000e-01 : f32
    %156 = vector.broadcast %cst_38 : f32 to vector<2x128xf32>
    %157 = arith.addf %155, %156 : vector<2x128xf32>
    %158 = arith.select %18, %153, %157 : vector<2x128xi1>, vector<2x128xf32>
    %159 = vector.extract_strided_slice %158 {offsets = [0, 0], sizes = [2, 32], strides = [1, 1]} : vector<2x128xf32> to vector<2x32xf32>
    %160 = vector.extract_strided_slice %158 {offsets = [0, 32], sizes = [2, 32], strides = [1, 1]} : vector<2x128xf32> to vector<2x32xf32>
    %161 = vector.extract_strided_slice %158 {offsets = [0, 64], sizes = [2, 32], strides = [1, 1]} : vector<2x128xf32> to vector<2x32xf32>
    %162 = vector.extract_strided_slice %158 {offsets = [0, 96], sizes = [2, 32], strides = [1, 1]} : vector<2x128xf32> to vector<2x32xf32>
    %163 = arith.mulf %160, %144 : vector<2x32xf32>
    %164 = arith.mulf %159, %161 : vector<2x32xf32>
    %165 = arith.addf %163, %164 : vector<2x32xf32>
    %166 = math.tanh %165 : vector<2x32xf32>
    %167 = arith.mulf %162, %166 : vector<2x32xf32>
    %168 = vector.extract_strided_slice %12 {offsets = [0, 28], sizes = [2, 4], strides = [1, 1]} : vector<2x32xf32> to vector<2x4xf32>
    %cst_39 = arith.constant dense<0.000000e+00> : vector<2x128xf32>
    %169 = tpu.matmul %168, %0, %cst_39 {dimension_numbers = #tpu.dot_dimension_numbers<[1], [0], [0], [1], [0, 0, 1, 1], [], []>} : vector<2x4xf32>, vector<4x128xf32>, vector<2x128xf32> -> vector<2x128xf32>
    %cst_40 = arith.constant dense<0.000000e+00> : vector<2x128xf32>
    %170 = tpu.matmul %167, %1, %cst_40 {dimension_numbers = #tpu.dot_dimension_numbers<[1], [0], [0], [1], [0, 0, 1, 1], [], []>} : vector<2x32xf32>, vector<32x128xf32>, vector<2x128xf32> -> vector<2x128xf32>
    %171 = arith.addf %169, %170 : vector<2x128xf32>
    %172 = arith.addf %171, %5 : vector<2x128xf32>
    %173 = arith.mulf %172, %21 : vector<2x128xf32>
    %174 = math.tanh %173 : vector<2x128xf32>
    %cst_41 = arith.constant 5.000000e-01 : f32
    %175 = vector.broadcast %cst_41 : f32 to vector<2x128xf32>
    %176 = arith.mulf %175, %174 : vector<2x128xf32>
    %cst_42 = arith.constant 5.000000e-01 : f32
    %177 = vector.broadcast %cst_42 : f32 to vector<2x128xf32>
    %178 = arith.addf %176, %177 : vector<2x128xf32>
    %179 = arith.select %18, %174, %178 : vector<2x128xi1>, vector<2x128xf32>
    %180 = vector.extract_strided_slice %179 {offsets = [0, 0], sizes = [2, 32], strides = [1, 1]} : vector<2x128xf32> to vector<2x32xf32>
    %181 = vector.extract_strided_slice %179 {offsets = [0, 32], sizes = [2, 32], strides = [1, 1]} : vector<2x128xf32> to vector<2x32xf32>
    %182 = vector.extract_strided_slice %179 {offsets = [0, 64], sizes = [2, 32], strides = [1, 1]} : vector<2x128xf32> to vector<2x32xf32>
    %183 = vector.extract_strided_slice %179 {offsets = [0, 96], sizes = [2, 32], strides = [1, 1]} : vector<2x128xf32> to vector<2x32xf32>
    %184 = arith.mulf %181, %165 : vector<2x32xf32>
    %185 = arith.mulf %180, %182 : vector<2x32xf32>
    %186 = arith.addf %184, %185 : vector<2x32xf32>
    %187 = math.tanh %186 : vector<2x32xf32>
    %188 = arith.mulf %183, %187 : vector<2x32xf32>
    %c0_43 = arith.constant 0 : index
    %c0_44 = arith.constant 0 : index
    %189 = vector.load %arg3[%c0_43, %c0_44] : memref<2x32xf32, #tpu.memory_space<vmem>>, vector<2x32xf32>
    tpu.vector_store %arg3[%c0_43, %c0_44], %186 {strides = array<i32>} : memref<2x32xf32, #tpu.memory_space<vmem>>, vector<2x32xf32>,
    %190 = vector.extract_strided_slice %188 {offsets = [0, 0], sizes = [1, 32], strides = [1, 1]} : vector<2x32xf32> to vector<1x32xf32>
    %c7 = arith.constant 7 : index
    %c0_45 = arith.constant 0 : index
    %191 = vector.load %arg5[%c7, %c0_45] : memref<16x32xf32, #tpu.memory_space<vmem>>, vector<1x32xf32>
    tpu.vector_store %arg5[%c7, %c0_45], %190 {strides = array<i32>} : memref<16x32xf32, #tpu.memory_space<vmem>>, vector<1x32xf32>,
    %192 = vector.extract_strided_slice %188 {offsets = [1, 0], sizes = [1, 32], strides = [1, 1]} : vector<2x32xf32> to vector<1x32xf32>
    %c15 = arith.constant 15 : index
    %c0_46 = arith.constant 0 : index
    %193 = vector.load %arg5[%c15, %c0_46] : memref<16x32xf32, #tpu.memory_space<vmem>>, vector<1x32xf32>
    tpu.vector_store %arg5[%c15, %c0_46], %192 {strides = array<i32>} : memref<16x32xf32, #tpu.memory_space<vmem>>, vector<1x32xf32>,
    %cst_47 = arith.constant dense<0.000000e+00> : vector<2x128xf32>
    %194 = tpu.matmul %188, %2, %cst_47 {dimension_numbers = #tpu.dot_dimension_numbers<[1], [0], [0], [1], [0, 0, 1, 1], [], []>} : vector<2x32xf32>, vector<32x128xf32>, vector<2x128xf32> -> vector<2x128xf32>
    %195 = arith.addf %194, %8 : vector<2x128xf32>
    %196 = arith.mulf %195, %21 : vector<2x128xf32>
    %197 = math.tanh %196 : vector<2x128xf32>
    %cst_48 = arith.constant 5.000000e-01 : f32
    %198 = vector.broadcast %cst_48 : f32 to vector<2x128xf32>
    %199 = arith.mulf %198, %197 : vector<2x128xf32>
    %cst_49 = arith.constant 5.000000e-01 : f32
    %200 = vector.broadcast %cst_49 : f32 to vector<2x128xf32>
    %201 = arith.addf %199, %200 : vector<2x128xf32>
    %202 = arith.select %18, %197, %201 : vector<2x128xi1>, vector<2x128xf32>
    %203 = vector.extract_strided_slice %202 {offsets = [0, 0], sizes = [2, 32], strides = [1, 1]} : vector<2x128xf32> to vector<2x32xf32>
    %204 = vector.extract_strided_slice %202 {offsets = [0, 32], sizes = [2, 32], strides = [1, 1]} : vector<2x128xf32> to vector<2x32xf32>
    %205 = vector.extract_strided_slice %202 {offsets = [0, 64], sizes = [2, 32], strides = [1, 1]} : vector<2x128xf32> to vector<2x32xf32>
    %206 = vector.extract_strided_slice %202 {offsets = [0, 96], sizes = [2, 32], strides = [1, 1]} : vector<2x128xf32> to vector<2x32xf32>
    %207 = arith.mulf %204, %186 : vector<2x32xf32>
    %208 = arith.mulf %203, %205 : vector<2x32xf32>
    %209 = arith.addf %207, %208 : vector<2x32xf32>
    %210 = math.tanh %209 : vector<2x32xf32>
    %211 = arith.mulf %206, %210 : vector<2x32xf32>
    %212 = vector.extract_strided_slice %211 {offsets = [0, 0], sizes = [1, 32], strides = [1, 1]} : vector<2x32xf32> to vector<1x32xf32>
    %c6 = arith.constant 6 : index
    %c0_50 = arith.constant 0 : index
    %213 = vector.load %arg5[%c6, %c0_50] : memref<16x32xf32, #tpu.memory_space<vmem>>, vector<1x32xf32>
    tpu.vector_store %arg5[%c6, %c0_50], %212 {strides = array<i32>} : memref<16x32xf32, #tpu.memory_space<vmem>>, vector<1x32xf32>,
    %214 = vector.extract_strided_slice %211 {offsets = [1, 0], sizes = [1, 32], strides = [1, 1]} : vector<2x32xf32> to vector<1x32xf32>
    %c14 = arith.constant 14 : index
    %c0_51 = arith.constant 0 : index
    %215 = vector.load %arg5[%c14, %c0_51] : memref<16x32xf32, #tpu.memory_space<vmem>>, vector<1x32xf32>
    tpu.vector_store %arg5[%c14, %c0_51], %214 {strides = array<i32>} : memref<16x32xf32, #tpu.memory_space<vmem>>, vector<1x32xf32>,
    %cst_52 = arith.constant dense<0.000000e+00> : vector<2x128xf32>
    %216 = tpu.matmul %211, %2, %cst_52 {dimension_numbers = #tpu.dot_dimension_numbers<[1], [0], [0], [1], [0, 0, 1, 1], [], []>} : vector<2x32xf32>, vector<32x128xf32>, vector<2x128xf32> -> vector<2x128xf32>
    %217 = arith.addf %216, %8 : vector<2x128xf32>
    %218 = arith.mulf %217, %21 : vector<2x128xf32>
    %219 = math.tanh %218 : vector<2x128xf32>
    %cst_53 = arith.constant 5.000000e-01 : f32
    %220 = vector.broadcast %cst_53 : f32 to vector<2x128xf32>
    %221 = arith.mulf %220, %219 : vector<2x128xf32>
    %cst_54 = arith.constant 5.000000e-01 : f32
    %222 = vector.broadcast %cst_54 : f32 to vector<2x128xf32>
    %223 = arith.addf %221, %222 : vector<2x128xf32>
    %224 = arith.select %18, %219, %223 : vector<2x128xi1>, vector<2x128xf32>
    %225 = vector.extract_strided_slice %224 {offsets = [0, 0], sizes = [2, 32], strides = [1, 1]} : vector<2x128xf32> to vector<2x32xf32>
    %226 = vector.extract_strided_slice %224 {offsets = [0, 32], sizes = [2, 32], strides = [1, 1]} : vector<2x128xf32> to vector<2x32xf32>
    %227 = vector.extract_strided_slice %224 {offsets = [0, 64], sizes = [2, 32], strides = [1, 1]} : vector<2x128xf32> to vector<2x32xf32>
    %228 = vector.extract_strided_slice %224 {offsets = [0, 96], sizes = [2, 32], strides = [1, 1]} : vector<2x128xf32> to vector<2x32xf32>
    %229 = arith.mulf %226, %209 : vector<2x32xf32>
    %230 = arith.mulf %225, %227 : vector<2x32xf32>
    %231 = arith.addf %229, %230 : vector<2x32xf32>
    %232 = math.tanh %231 : vector<2x32xf32>
    %233 = arith.mulf %228, %232 : vector<2x32xf32>
    %234 = vector.extract_strided_slice %233 {offsets = [0, 0], sizes = [1, 32], strides = [1, 1]} : vector<2x32xf32> to vector<1x32xf32>
    %c5 = arith.constant 5 : index
    %c0_55 = arith.constant 0 : index
    %235 = vector.load %arg5[%c5, %c0_55] : memref<16x32xf32, #tpu.memory_space<vmem>>, vector<1x32xf32>
    tpu.vector_store %arg5[%c5, %c0_55], %234 {strides = array<i32>} : memref<16x32xf32, #tpu.memory_space<vmem>>, vector<1x32xf32>,
    %236 = vector.extract_strided_slice %233 {offsets = [1, 0], sizes = [1, 32], strides = [1, 1]} : vector<2x32xf32> to vector<1x32xf32>
    %c13 = arith.constant 13 : index
    %c0_56 = arith.constant 0 : index
    %237 = vector.load %arg5[%c13, %c0_56] : memref<16x32xf32, #tpu.memory_space<vmem>>, vector<1x32xf32>
    tpu.vector_store %arg5[%c13, %c0_56], %236 {strides = array<i32>} : memref<16x32xf32, #tpu.memory_space<vmem>>, vector<1x32xf32>,
    %cst_57 = arith.constant dense<0.000000e+00> : vector<2x128xf32>
    %238 = tpu.matmul %233, %2, %cst_57 {dimension_numbers = #tpu.dot_dimension_numbers<[1], [0], [0], [1], [0, 0, 1, 1], [], []>} : vector<2x32xf32>, vector<32x128xf32>, vector<2x128xf32> -> vector<2x128xf32>
    %239 = arith.addf %238, %8 : vector<2x128xf32>
    %240 = arith.mulf %239, %21 : vector<2x128xf32>
    %241 = math.tanh %240 : vector<2x128xf32>
    %cst_58 = arith.constant 5.000000e-01 : f32
    %242 = vector.broadcast %cst_58 : f32 to vector<2x128xf32>
    %243 = arith.mulf %242, %241 : vector<2x128xf32>
    %cst_59 = arith.constant 5.000000e-01 : f32
    %244 = vector.broadcast %cst_59 : f32 to vector<2x128xf32>
    %245 = arith.addf %243, %244 : vector<2x128xf32>
    %246 = arith.select %18, %241, %245 : vector<2x128xi1>, vector<2x128xf32>
    %247 = vector.extract_strided_slice %246 {offsets = [0, 0], sizes = [2, 32], strides = [1, 1]} : vector<2x128xf32> to vector<2x32xf32>
    %248 = vector.extract_strided_slice %246 {offsets = [0, 32], sizes = [2, 32], strides = [1, 1]} : vector<2x128xf32> to vector<2x32xf32>
    %249 = vector.extract_strided_slice %246 {offsets = [0, 64], sizes = [2, 32], strides = [1, 1]} : vector<2x128xf32> to vector<2x32xf32>
    %250 = vector.extract_strided_slice %246 {offsets = [0, 96], sizes = [2, 32], strides = [1, 1]} : vector<2x128xf32> to vector<2x32xf32>
    %251 = arith.mulf %248, %231 : vector<2x32xf32>
    %252 = arith.mulf %247, %249 : vector<2x32xf32>
    %253 = arith.addf %251, %252 : vector<2x32xf32>
    %254 = math.tanh %253 : vector<2x32xf32>
    %255 = arith.mulf %250, %254 : vector<2x32xf32>
    %256 = vector.extract_strided_slice %255 {offsets = [0, 0], sizes = [1, 32], strides = [1, 1]} : vector<2x32xf32> to vector<1x32xf32>
    %c4_60 = arith.constant 4 : index
    %c0_61 = arith.constant 0 : index
    %257 = vector.load %arg5[%c4_60, %c0_61] : memref<16x32xf32, #tpu.memory_space<vmem>>, vector<1x32xf32>
    tpu.vector_store %arg5[%c4_60, %c0_61], %256 {strides = array<i32>} : memref<16x32xf32, #tpu.memory_space<vmem>>, vector<1x32xf32>,
    %258 = vector.extract_strided_slice %255 {offsets = [1, 0], sizes = [1, 32], strides = [1, 1]} : vector<2x32xf32> to vector<1x32xf32>
    %c12 = arith.constant 12 : index
    %c0_62 = arith.constant 0 : index
    %259 = vector.load %arg5[%c12, %c0_62] : memref<16x32xf32, #tpu.memory_space<vmem>>, vector<1x32xf32>
    tpu.vector_store %arg5[%c12, %c0_62], %258 {strides = array<i32>} : memref<16x32xf32, #tpu.memory_space<vmem>>, vector<1x32xf32>,
    %cst_63 = arith.constant dense<0.000000e+00> : vector<2x128xf32>
    %260 = tpu.matmul %255, %2, %cst_63 {dimension_numbers = #tpu.dot_dimension_numbers<[1], [0], [0], [1], [0, 0, 1, 1], [], []>} : vector<2x32xf32>, vector<32x128xf32>, vector<2x128xf32> -> vector<2x128xf32>
    %261 = arith.addf %260, %8 : vector<2x128xf32>
    %262 = arith.mulf %261, %21 : vector<2x128xf32>
    %263 = math.tanh %262 : vector<2x128xf32>
    %cst_64 = arith.constant 5.000000e-01 : f32
    %264 = vector.broadcast %cst_64 : f32 to vector<2x128xf32>
    %265 = arith.mulf %264, %263 : vector<2x128xf32>
    %cst_65 = arith.constant 5.000000e-01 : f32
    %266 = vector.broadcast %cst_65 : f32 to vector<2x128xf32>
    %267 = arith.addf %265, %266 : vector<2x128xf32>
    %268 = arith.select %18, %263, %267 : vector<2x128xi1>, vector<2x128xf32>
    %269 = vector.extract_strided_slice %268 {offsets = [0, 0], sizes = [2, 32], strides = [1, 1]} : vector<2x128xf32> to vector<2x32xf32>
    %270 = vector.extract_strided_slice %268 {offsets = [0, 32], sizes = [2, 32], strides = [1, 1]} : vector<2x128xf32> to vector<2x32xf32>
    %271 = vector.extract_strided_slice %268 {offsets = [0, 64], sizes = [2, 32], strides = [1, 1]} : vector<2x128xf32> to vector<2x32xf32>
    %272 = vector.extract_strided_slice %268 {offsets = [0, 96], sizes = [2, 32], strides = [1, 1]} : vector<2x128xf32> to vector<2x32xf32>
    %273 = arith.mulf %270, %253 : vector<2x32xf32>
    %274 = arith.mulf %269, %271 : vector<2x32xf32>
    %275 = arith.addf %273, %274 : vector<2x32xf32>
    %276 = math.tanh %275 : vector<2x32xf32>
    %277 = arith.mulf %272, %276 : vector<2x32xf32>
    %278 = vector.extract_strided_slice %277 {offsets = [0, 0], sizes = [1, 32], strides = [1, 1]} : vector<2x32xf32> to vector<1x32xf32>
    %c3 = arith.constant 3 : index
    %c0_66 = arith.constant 0 : index
    %279 = vector.load %arg5[%c3, %c0_66] : memref<16x32xf32, #tpu.memory_space<vmem>>, vector<1x32xf32>
    tpu.vector_store %arg5[%c3, %c0_66], %278 {strides = array<i32>} : memref<16x32xf32, #tpu.memory_space<vmem>>, vector<1x32xf32>,
    %280 = vector.extract_strided_slice %277 {offsets = [1, 0], sizes = [1, 32], strides = [1, 1]} : vector<2x32xf32> to vector<1x32xf32>
    %c11 = arith.constant 11 : index
    %c0_67 = arith.constant 0 : index
    %281 = vector.load %arg5[%c11, %c0_67] : memref<16x32xf32, #tpu.memory_space<vmem>>, vector<1x32xf32>
    tpu.vector_store %arg5[%c11, %c0_67], %280 {strides = array<i32>} : memref<16x32xf32, #tpu.memory_space<vmem>>, vector<1x32xf32>,
    %cst_68 = arith.constant dense<0.000000e+00> : vector<2x128xf32>
    %282 = tpu.matmul %277, %2, %cst_68 {dimension_numbers = #tpu.dot_dimension_numbers<[1], [0], [0], [1], [0, 0, 1, 1], [], []>} : vector<2x32xf32>, vector<32x128xf32>, vector<2x128xf32> -> vector<2x128xf32>
    %283 = arith.addf %282, %8 : vector<2x128xf32>
    %284 = arith.mulf %283, %21 : vector<2x128xf32>
    %285 = math.tanh %284 : vector<2x128xf32>
    %cst_69 = arith.constant 5.000000e-01 : f32
    %286 = vector.broadcast %cst_69 : f32 to vector<2x128xf32>
    %287 = arith.mulf %286, %285 : vector<2x128xf32>
    %cst_70 = arith.constant 5.000000e-01 : f32
    %288 = vector.broadcast %cst_70 : f32 to vector<2x128xf32>
    %289 = arith.addf %287, %288 : vector<2x128xf32>
    %290 = arith.select %18, %285, %289 : vector<2x128xi1>, vector<2x128xf32>
    %291 = vector.extract_strided_slice %290 {offsets = [0, 0], sizes = [2, 32], strides = [1, 1]} : vector<2x128xf32> to vector<2x32xf32>
    %292 = vector.extract_strided_slice %290 {offsets = [0, 32], sizes = [2, 32], strides = [1, 1]} : vector<2x128xf32> to vector<2x32xf32>
    %293 = vector.extract_strided_slice %290 {offsets = [0, 64], sizes = [2, 32], strides = [1, 1]} : vector<2x128xf32> to vector<2x32xf32>
    %294 = vector.extract_strided_slice %290 {offsets = [0, 96], sizes = [2, 32], strides = [1, 1]} : vector<2x128xf32> to vector<2x32xf32>
    %295 = arith.mulf %292, %275 : vector<2x32xf32>
    %296 = arith.mulf %291, %293 : vector<2x32xf32>
    %297 = arith.addf %295, %296 : vector<2x32xf32>
    %298 = math.tanh %297 : vector<2x32xf32>
    %299 = arith.mulf %294, %298 : vector<2x32xf32>
    %300 = vector.extract_strided_slice %299 {offsets = [0, 0], sizes = [1, 32], strides = [1, 1]} : vector<2x32xf32> to vector<1x32xf32>
    %c2 = arith.constant 2 : index
    %c0_71 = arith.constant 0 : index
    %301 = vector.load %arg5[%c2, %c0_71] : memref<16x32xf32, #tpu.memory_space<vmem>>, vector<1x32xf32>
    tpu.vector_store %arg5[%c2, %c0_71], %300 {strides = array<i32>} : memref<16x32xf32, #tpu.memory_space<vmem>>, vector<1x32xf32>,
    %302 = vector.extract_strided_slice %299 {offsets = [1, 0], sizes = [1, 32], strides = [1, 1]} : vector<2x32xf32> to vector<1x32xf32>
    %c10 = arith.constant 10 : index
    %c0_72 = arith.constant 0 : index
    %303 = vector.load %arg5[%c10, %c0_72] : memref<16x32xf32, #tpu.memory_space<vmem>>, vector<1x32xf32>
    tpu.vector_store %arg5[%c10, %c0_72], %302 {strides = array<i32>} : memref<16x32xf32, #tpu.memory_space<vmem>>, vector<1x32xf32>,
    %cst_73 = arith.constant dense<0.000000e+00> : vector<2x128xf32>
    %304 = tpu.matmul %299, %2, %cst_73 {dimension_numbers = #tpu.dot_dimension_numbers<[1], [0], [0], [1], [0, 0, 1, 1], [], []>} : vector<2x32xf32>, vector<32x128xf32>, vector<2x128xf32> -> vector<2x128xf32>
    %305 = arith.addf %304, %8 : vector<2x128xf32>
    %306 = arith.mulf %305, %21 : vector<2x128xf32>
    %307 = math.tanh %306 : vector<2x128xf32>
    %cst_74 = arith.constant 5.000000e-01 : f32
    %308 = vector.broadcast %cst_74 : f32 to vector<2x128xf32>
    %309 = arith.mulf %308, %307 : vector<2x128xf32>
    %cst_75 = arith.constant 5.000000e-01 : f32
    %310 = vector.broadcast %cst_75 : f32 to vector<2x128xf32>
    %311 = arith.addf %309, %310 : vector<2x128xf32>
    %312 = arith.select %18, %307, %311 : vector<2x128xi1>, vector<2x128xf32>
    %313 = vector.extract_strided_slice %312 {offsets = [0, 0], sizes = [2, 32], strides = [1, 1]} : vector<2x128xf32> to vector<2x32xf32>
    %314 = vector.extract_strided_slice %312 {offsets = [0, 32], sizes = [2, 32], strides = [1, 1]} : vector<2x128xf32> to vector<2x32xf32>
    %315 = vector.extract_strided_slice %312 {offsets = [0, 64], sizes = [2, 32], strides = [1, 1]} : vector<2x128xf32> to vector<2x32xf32>
    %316 = vector.extract_strided_slice %312 {offsets = [0, 96], sizes = [2, 32], strides = [1, 1]} : vector<2x128xf32> to vector<2x32xf32>
    %317 = arith.mulf %314, %297 : vector<2x32xf32>
    %318 = arith.mulf %313, %315 : vector<2x32xf32>
    %319 = arith.addf %317, %318 : vector<2x32xf32>
    %320 = math.tanh %319 : vector<2x32xf32>
    %321 = arith.mulf %316, %320 : vector<2x32xf32>
    %322 = vector.extract_strided_slice %321 {offsets = [0, 0], sizes = [1, 32], strides = [1, 1]} : vector<2x32xf32> to vector<1x32xf32>
    %c1 = arith.constant 1 : index
    %c0_76 = arith.constant 0 : index
    %323 = vector.load %arg5[%c1, %c0_76] : memref<16x32xf32, #tpu.memory_space<vmem>>, vector<1x32xf32>
    tpu.vector_store %arg5[%c1, %c0_76], %322 {strides = array<i32>} : memref<16x32xf32, #tpu.memory_space<vmem>>, vector<1x32xf32>,
    %324 = vector.extract_strided_slice %321 {offsets = [1, 0], sizes = [1, 32], strides = [1, 1]} : vector<2x32xf32> to vector<1x32xf32>
    %c9 = arith.constant 9 : index
    %c0_77 = arith.constant 0 : index
    %325 = vector.load %arg5[%c9, %c0_77] : memref<16x32xf32, #tpu.memory_space<vmem>>, vector<1x32xf32>
    tpu.vector_store %arg5[%c9, %c0_77], %324 {strides = array<i32>} : memref<16x32xf32, #tpu.memory_space<vmem>>, vector<1x32xf32>,
    %cst_78 = arith.constant dense<0.000000e+00> : vector<2x128xf32>
    %326 = tpu.matmul %321, %2, %cst_78 {dimension_numbers = #tpu.dot_dimension_numbers<[1], [0], [0], [1], [0, 0, 1, 1], [], []>} : vector<2x32xf32>, vector<32x128xf32>, vector<2x128xf32> -> vector<2x128xf32>
    %327 = arith.addf %326, %8 : vector<2x128xf32>
    %328 = arith.mulf %327, %21 : vector<2x128xf32>
    %329 = math.tanh %328 : vector<2x128xf32>
    %cst_79 = arith.constant 5.000000e-01 : f32
    %330 = vector.broadcast %cst_79 : f32 to vector<2x128xf32>
    %331 = arith.mulf %330, %329 : vector<2x128xf32>
    %cst_80 = arith.constant 5.000000e-01 : f32
    %332 = vector.broadcast %cst_80 : f32 to vector<2x128xf32>
    %333 = arith.addf %331, %332 : vector<2x128xf32>
    %334 = arith.select %18, %329, %333 : vector<2x128xi1>, vector<2x128xf32>
    %335 = vector.extract_strided_slice %334 {offsets = [0, 0], sizes = [2, 32], strides = [1, 1]} : vector<2x128xf32> to vector<2x32xf32>
    %336 = vector.extract_strided_slice %334 {offsets = [0, 32], sizes = [2, 32], strides = [1, 1]} : vector<2x128xf32> to vector<2x32xf32>
    %337 = vector.extract_strided_slice %334 {offsets = [0, 64], sizes = [2, 32], strides = [1, 1]} : vector<2x128xf32> to vector<2x32xf32>
    %338 = vector.extract_strided_slice %334 {offsets = [0, 96], sizes = [2, 32], strides = [1, 1]} : vector<2x128xf32> to vector<2x32xf32>
    %339 = arith.mulf %336, %319 : vector<2x32xf32>
    %340 = arith.mulf %335, %337 : vector<2x32xf32>
    %341 = arith.addf %339, %340 : vector<2x32xf32>
    %342 = math.tanh %341 : vector<2x32xf32>
    %343 = arith.mulf %338, %342 : vector<2x32xf32>
    %344 = vector.extract_strided_slice %343 {offsets = [0, 0], sizes = [1, 32], strides = [1, 1]} : vector<2x32xf32> to vector<1x32xf32>
    %c0_81 = arith.constant 0 : index
    %c0_82 = arith.constant 0 : index
    %345 = vector.load %arg5[%c0_81, %c0_82] : memref<16x32xf32, #tpu.memory_space<vmem>>, vector<1x32xf32>
    tpu.vector_store %arg5[%c0_81, %c0_82], %344 {strides = array<i32>} : memref<16x32xf32, #tpu.memory_space<vmem>>, vector<1x32xf32>,
    %346 = vector.extract_strided_slice %343 {offsets = [1, 0], sizes = [1, 32], strides = [1, 1]} : vector<2x32xf32> to vector<1x32xf32>
    %c8_83 = arith.constant 8 : index
    %c0_84 = arith.constant 0 : index
    %347 = vector.load %arg5[%c8_83, %c0_84] : memref<16x32xf32, #tpu.memory_space<vmem>>, vector<1x32xf32>
    tpu.vector_store %arg5[%c8_83, %c0_84], %346 {strides = array<i32>} : memref<16x32xf32, #tpu.memory_space<vmem>>, vector<1x32xf32>,
    %c0_85 = arith.constant 0 : index
    %c0_86 = arith.constant 0 : index
    %348 = vector.load %arg5[%c0_85, %c0_86] : memref<16x32xf32, #tpu.memory_space<vmem>>, vector<16x32xf32>
    %cst_87 = arith.constant dense<0.000000e+00> : vector<16x4xf32>
    %349 = tpu.matmul %348, %10, %cst_87 {dimension_numbers = #tpu.dot_dimension_numbers<[1], [0], [0], [1], [0, 0, 1, 1], [], []>} : vector<16x32xf32>, vector<32x4xf32>, vector<16x4xf32> -> vector<16x4xf32>
    %350 = vector.broadcast %9 : vector<1x4xf32> to vector<16x4xf32>
    %351 = arith.addf %349, %350 : vector<16x4xf32>
    %c0_88 = arith.constant 0 : index
    %c0_89 = arith.constant 0 : index
    %352 = vector.load %arg2[%c0_88, %c0_89] : memref<16x4xf32, #tpu.memory_space<vmem>>, vector<16x4xf32>
    tpu.vector_store %arg2[%c0_88, %c0_89], %351 {strides = array<i32>} : memref<16x4xf32, #tpu.memory_space<vmem>>, vector<16x4xf32>,
    %353 = arith.mulf %11, %11 : vector<32x4xf32>
    %cst_90 = arith.constant dense<0.000000e+00> : vector<4xf32>
    %354 = vector.multi_reduction <add>, %353, %cst_90 [0] : vector<32x4xf32> to vector<4xf32>
    %355 = vector.shape_cast %354 : vector<4xf32> to vector<1x4xf32>
    %356 = arith.mulf %188, %188 : vector<2x32xf32>
    %cst_91 = arith.constant dense<0.000000e+00> : vector<2xf32>
    %357 = vector.multi_reduction <add>, %356, %cst_91 [1] : vector<2x32xf32> to vector<2xf32>
    %358 = vector.shape_cast %357 : vector<2xf32> to vector<2x1xf32>
    %cst_92 = arith.constant dense<0.000000e+00> : vector<2x4xf32>
    %359 = tpu.matmul %188, %11, %cst_92 {dimension_numbers = #tpu.dot_dimension_numbers<[1], [0], [0], [1], [0, 0, 1, 1], [], []>} : vector<2x32xf32>, vector<32x4xf32>, vector<2x4xf32> -> vector<2x4xf32>
    %cst_93 = arith.constant 2.000000e+00 : f32
    %360 = vector.broadcast %cst_93 : f32 to vector<2x4xf32>
    %361 = arith.mulf %360, %359 : vector<2x4xf32>
    %362 = vector.broadcast %358 : vector<2x1xf32> to vector<2x4xf32>
    %363 = arith.subf %362, %361 : vector<2x4xf32>
    %364 = vector.broadcast %355 : vector<1x4xf32> to vector<2x4xf32>
    %365 = arith.addf %363, %364 : vector<2x4xf32>
    %cst_94 = arith.constant 0.000000e+00 : f32
    %366 = vector.broadcast %cst_94 : f32 to vector<2x4xf32>
    %367 = arith.maximumf %365, %366 : vector<2x4xf32>
    %cst_95 = arith.constant 0.000000e+00 : f32
    %368 = vector.broadcast %cst_95 : f32 to vector<2x4xf32>
    %369 = arith.subf %368, %367 : vector<2x4xf32>
    %370 = math.exp %369 : vector<2x4xf32>
    %c0_96 = arith.constant 0 : index
    %c0_97 = arith.constant 0 : index
    %371 = vector.load %arg4[%c0_96, %c0_97] : memref<2x4xf32, #tpu.memory_space<vmem>>, vector<2x4xf32>
    tpu.vector_store %arg4[%c0_96, %c0_97], %370 {strides = array<i32>} : memref<2x4xf32, #tpu.memory_space<vmem>>, vector<2x4xf32>,
    return
  }
}

</mosaic_0001>

<llo_original>
// kernel: lstmed_forward.1
$region0: #{lstmed_forward.1}
  #allocation0 [shape = 'u32[]', space=smem, size = 0x4, offset = 0x4, fixed_abs, tag = 'smem constant byte address 0x4 - core index']
  #allocation1 [shape = 'u32[144,128]{1,0:T(1,128)}', space=vmem, size = 0x12000, scoped, tag = 'internal scratch']
  #allocation2 [shape = 'f32[16,32]{1,0:T(8,128)}', space=vmem, size = 0x2000, scoped, tag = 'scratch operand']
  %s0 = inlined_call_operand.vmem [shape: f32[2,32], index: 0, kind: input, shape index: {}]
  %s1 = inlined_call_operand.hbm [shape: f32[112,128], index: 1, kind: input, shape index: {}]
  %s2 = inlined_call_operand.vmem [shape: f32[16,4], index: 2, kind: output, shape index: {0}]
  %s3 = inlined_call_operand.hbm [shape: f32[2,32], index: 3, kind: output, shape index: {1}]
  %s4 = inlined_call_operand.hbm [shape: f32[2,4], index: 4, kind: output, shape index: {2}]
  %5 = xla_tuple %s2, %s3, %s4
  %s6 = sld [smem:[#allocation0]]
  $region38: #{lstmed_forward.1} parent=0
    _
  %s8 = ssub.s32 1, %s6
  %s9 = scalar_select 0, %s8, %s6
  $region1: #{lstmed_forward.1} parent=0
    #allocation3 [shape = 'u8[57344]{0}', space=vmem, size = 0xe000, scoped, tag = 'input window, operand 1, single buffered']
    #allocation4 [shape = 's32[1]{0}', space=sflag, size = 0x4, scoped, tag = 'scoped memory for lstmed_forward.1']
    #allocation5 [shape = 's32[1]{0}', space=sflag, size = 0x4, scoped, tag = 'scoped memory for lstmed_forward.1']
    #allocation6 [shape = 'u8[1024]{0}', space=vmem, size = 0x400, scoped, tag = 'output window, operand 1, single buffered']
    #allocation7 [shape = 'u8[1024]{0}', space=vmem, size = 0x400, scoped, tag = 'output window, operand 2, single buffered']
    #allocation8 [shape = 's32[1]{0}', space=sflag, size = 0x4, scoped, tag = 'scoped memory for lstmed_forward.1']
    %10 = vsyncpa [#allocation4], 0
    %11 = vsyncpa [#allocation5], 0
    %12 = vsyncpa [#allocation8], 0
    // Predicated region
    $region2: #{lstmed_forward.1} parent=1 // pred_check
      _
    $region3: #{lstmed_forward.1} parent=1 // pred_check_branch
      %14 = sbr.rel (0) target = $region5
    $region4: #{lstmed_forward.1} parent=1 // pred_region
      _
    $region5: #{lstmed_forward.1} parent=1 // pred_fallthru
      _
    // Predicated region
    $region6: #{lstmed_forward.1} parent=1 // pred_check
      _
    $region7: #{lstmed_forward.1} parent=1 // pred_check_branch
      %16 = sbr.rel (0) target = $region9
    $region8: #{lstmed_forward.1} parent=1 // pred_region
      %s18 = ssub.s32 1792, 1792
      %19 = vsyncadd [#allocation4], %s18
      %s20 = sshll.u32 [#allocation3], 4
      %s21 = int_to_ptr.vmem [resolvable:$true] %s20
      %26 = dma.hbm_to_vmem [thread:$0]  %s1, 1792, %s21, [#allocation4], 128, 128, 8
    $region9: #{lstmed_forward.1} parent=1 // pred_fallthru
      _
    // Predicated region
    $region10: #{lstmed_forward.1} parent=1 // pred_check
      _
    $region11: #{lstmed_forward.1} parent=1 // pred_check_branch
      %28 = sbr.rel (0) target = $region13
    $region12: #{lstmed_forward.1} parent=1 // pred_region
      %29 = dma.done [#allocation4], 1792
    $region13: #{lstmed_forward.1} parent=1 // pred_fallthru
      _
    %v30 = vld [vmem:[#allocation3] sm:$0xf]
    %v31 = vld [vmem:[#allocation3 + $0x8] sm:$0xff]
    %v32 = vld [vmem:[#allocation3 + $0x10] sm:$0xff]
    %v33 = vld [vmem:[#allocation3 + $0x18] sm:$0xff]
    %v34 = vld [vmem:[#allocation3 + $0x20] sm:$0xff]
    %v35 = vld [vmem:[#allocation3 + $0x28] sm:$0xff]
    %v36 = vld [vmem:[#allocation3 + $0x30] sm:$0xff]
    %v37 = vld [vmem:[#allocation3 + $0x38] sm:$0xff]
    %v38 = vld [vmem:[#allocation3 + $0x40] sm:$0xff]
    %v39 = vld [vmem:[#allocation3 + $0x48] sm:$0x1]
    %v40 = vlaneseq
    %v41 = vshrl.u32 %v40, 7
    %v42 = vsub.s32 0, %v41
    %v43 = vrot.slane %v39, %v42
    %v44 = vld [vmem:[#allocation3 + $0x49] sm:$0x1]
    %v45 = vlaneseq
    %v46 = vshrl.u32 %v45, 7
    %v47 = vsub.s32 0, %v46
    %v48 = vrot.slane %v44, %v47
    %v49 = vld [vmem:[#allocation3 + $0x4a] sm:$0x1]
    %v50 = vld [vmem:[#allocation3 + $0x50] sm:$0xff]
    %v51 = vld [vmem:[#allocation3 + $0x58] sm:$0xff]
    %v52 = vld [vmem:[#allocation3 + $0x60] sm:$0xff]
    %v53 = vld [vmem:[#allocation3 + $0x68] sm:$0xff]
    %v54 = vld [vmem:[%s0] sm:$0x3]
    %v55 = vlaneseq
    %v56 = vand.u32 %v55, 127
    %vm57 = vcmp.ge.s32.totalorder %v56, 64
    %vm58 = vcmp.lt.s32.totalorder %v56, 96
    %vm59 = vmand %vm57, %vm58
    %v60 = vsel %vm59, 1.0, 0.5
    %vm61 = vcmask 31744
    %v63 = vsel %vm61, %v54, 0
    %vm65 = vcmask 1043456
    %v67 = vsel %vm65, %v30, 0
    %69 = vmatprep.subr.mxu0 0.0
    %70 = vmatpush1.msra.mxu0 0.0
    %71 = vmatprep.subr.mxu0 0.0
    %72 = vmatpush1.msra.mxu0 0.0
    %73 = vmatprep.subr.mxu0 0.0
    %74 = vmatpush1.msra.mxu0 0.0
    %75 = vmatprep.subr.mxu0 0.0
    %76 = vmatpush1.msra.mxu0 0.0
    %77 = vmatprep.subr.mxu0 0.0
    %78 = vmatpush1.msra.mxu0 0.0
    %79 = vmatprep.subr.mxu0 0.0
    %80 = vmatpush1.msra.mxu0 0.0
    %81 = vmatprep.subr.mxu0 0.0
    %82 = vmatpush1.msra.mxu0 0.0
    %83 = vmatprep.subr.mxu0 0.0
    %84 = vmatpush1.msra.mxu0 0.0
    %85 = vmatprep.subr.mxu0 0.0
    %86 = vmatpush1.msra.mxu0 0.0
    %87 = vmatprep.subr.mxu0 0.0
    %88 = vmatpush1.msra.mxu0 0.0
    %89 = vmatprep.subr.mxu0 0.0
    %90 = vmatpush1.msra.mxu0 0.0
    %91 = vmatprep.subr.mxu0 0.0
    %92 = vmatpush1.msra.mxu0 0.0
    %93 = vmatprep.subr.mxu0 0.0
    %94 = vmatpush1.msra.mxu0 0.0
    %95 = vmatprep.subr.mxu0 0.0
    %96 = vmatpush1.msra.mxu0 0.0
    %97 = vmatprep.subr.mxu0 0.0
    %98 = vmatpush1.msra.mxu0 0.0
    %99 = vmatprep.subr.mxu0 0.0
    %100 = vmatpush1.msra.mxu0 %v67
    %101 = vmatprep.subr.mxu0 0.0
    %102 = vmatpush2.msra.mxu0 0.0
    %103 = vmatprep.subr.mxu0 0.0
    %104 = vmatpush2.msra.mxu0 0.0
    %105 = vmatprep.subr.mxu0 0.0
    %106 = vmatpush2.msra.mxu0 0.0
    %107 = vmatprep.subr.mxu0 0.0
    %108 = vmatpush2.msra.mxu0 0.0
    %109 = vmatprep.subr.mxu0 0.0
    %110 = vmatpush2.msra.mxu0 0.0
    %111 = vmatprep.subr.mxu0 0.0
    %112 = vmatpush2.msra.mxu0 0.0
    %113 = vmatprep.subr.mxu0 0.0
    %114 = vmatpush2.msra.mxu0 0.0
    %115 = vmatprep.subr.mxu0 0.0
    %116 = vmatpush2.msra.mxu0 0.0
    %117 = vmatprep.subr.mxu0 0.0
    %118 = vmatpush2.msra.mxu0 0.0
    %119 = vmatprep.subr.mxu0 0.0
    %120 = vmatpush2.msra.mxu0 0.0
    %121 = vmatprep.subr.mxu0 0.0
    %122 = vmatpush2.msra.mxu0 0.0
    %123 = vmatprep.subr.mxu0 0.0
    %124 = vmatpush2.msra.mxu0 0.0
    %125 = vmatprep.subr.mxu0 0.0
    %126 = vmatpush2.msra.mxu0 0.0
    %127 = vmatprep.subr.mxu0 0.0
    %128 = vmatpush2.msra.mxu0 0.0
    %129 = vmatprep.subr.mxu0 0.0
    %130 = vmatpush2.msra.mxu0 0.0
    %131 = vmatprep.subr.mxu0 0.0
    %132 = vmatpush2.msra.mxu0 0.0
    %133 = vmatprep.mubr.f32.mxu0 0.0
    %134 = vmatmul.mubr.f32.gmra.mxu0 %v63
    %v135 = vpop.f32.mrf.mxu0
    %v136 = vadd.f32 %v43, %v135
    %v137 = vpop.f32.mrf.mxu0
    %138 = vdwg.mxu0
    %v139 = vmul.f32 %v136, %v60
    %v140 = vtanh.pop %v139
    %v141 = vmul.f32 %v140, 0.5
    %v142 = vadd.f32 %v141, 0.5
    %v143 = vsel %vm59, %v140, %v142
    %v144 = vmul.f32 %v143, 0.0
    %146 = vrot.lane.b32.xlu0 %v143, 64
    %v147 = vpop.permute.xlu0 %146
    %v149 = vmul.f32 %v143, %v147
    %151 = vrot.lane.b32.xlu0 %v149, 32
    %v152 = vpop.permute.xlu0 %151
    %v154 = vadd.f32 %v144, %v152
    %v155 = vtanh.pop %v154
    %157 = vrot.lane.b32.xlu0 %v155, 64
    %v158 = vpop.permute.xlu0 %157
    %v160 = vmul.f32 %v143, %v158
    %162 = vrot.lane.b32.xlu0 %v160, 32
    %v163 = vpop.permute.xlu0 %162
    %vm164 = vcmask 261120
    %v165 = vsel %vm164, %v163, 0
    %167 = vmatprep.subr.mxu0 0.0
    %168 = vmatpush1.msra.mxu0 0.0
    %169 = vmatprep.subr.mxu0 0.0
    %170 = vmatpush1.msra.mxu0 0.0
    %171 = vmatprep.subr.mxu0 0.0
    %172 = vmatpush1.msra.mxu0 0.0
    %173 = vmatprep.subr.mxu0 0.0
    %174 = vmatpush1.msra.mxu0 0.0
    %175 = vmatprep.subr.mxu0 0.0
    %176 = vmatpush1.msra.mxu0 0.0
    %177 = vmatprep.subr.mxu0 0.0
    %178 = vmatpush1.msra.mxu0 0.0
    %179 = vmatprep.subr.mxu0 0.0
    %180 = vmatpush1.msra.mxu0 0.0
    %181 = vmatprep.subr.mxu0 0.0
    %182 = vmatpush1.msra.mxu0 0.0
    %183 = vmatprep.subr.mxu0 0.0
    %184 = vmatpush1.msra.mxu0 0.0
    %185 = vmatprep.subr.mxu0 0.0
    %186 = vmatpush1.msra.mxu0 0.0
    %187 = vmatprep.subr.mxu0 0.0
    %188 = vmatpush1.msra.mxu0 0.0
    %189 = vmatprep.subr.mxu0 0.0
    %190 = vmatpush1.msra.mxu0 0.0
    %191 = vmatprep.subr.mxu0 0.0
    %192 = vmatpush1.msra.mxu0 %v34
    %193 = vmatprep.subr.mxu0 0.0
    %194 = vmatpush1.msra.mxu0 %v33
    %195 = vmatprep.subr.mxu0 0.0
    %196 = vmatpush1.msra.mxu0 %v32
    %197 = vmatprep.subr.mxu0 0.0
    %198 = vmatpush1.msra.mxu0 %v31
    %199 = vmatprep.subr.mxu0 0.0
    %200 = vmatpush2.msra.mxu0 0.0
    %201 = vmatprep.subr.mxu0 0.0
    %202 = vmatpush2.msra.mxu0 0.0
    %203 = vmatprep.subr.mxu0 0.0
    %204 = vmatpush2.msra.mxu0 0.0
    %205 = vmatprep.subr.mxu0 0.0
    %206 = vmatpush2.msra.mxu0 0.0
    %207 = vmatprep.subr.mxu0 0.0
    %208 = vmatpush2.msra.mxu0 0.0
    %209 = vmatprep.subr.mxu0 0.0
    %210 = vmatpush2.msra.mxu0 0.0
    %211 = vmatprep.subr.mxu0 0.0
    %212 = vmatpush2.msra.mxu0 0.0
    %213 = vmatprep.subr.mxu0 0.0
    %214 = vmatpush2.msra.mxu0 0.0
    %215 = vmatprep.subr.mxu0 0.0
    %216 = vmatpush2.msra.mxu0 0.0
    %217 = vmatprep.subr.mxu0 0.0
    %218 = vmatpush2.msra.mxu0 0.0
    %219 = vmatprep.subr.mxu0 0.0
    %220 = vmatpush2.msra.mxu0 0.0
    %221 = vmatprep.subr.mxu0 0.0
    %222 = vmatpush2.msra.mxu0 0.0
    %223 = vmatprep.subr.mxu0 0.0
    %224 = vmatpush2.msra.mxu0 0.0
    %225 = vmatprep.subr.mxu0 0.0
    %226 = vmatpush2.msra.mxu0 0.0
    %227 = vmatprep.subr.mxu0 0.0
    %228 = vmatpush2.msra.mxu0 0.0
    %229 = vmatprep.subr.mxu0 0.0
    %230 = vmatpush2.msra.mxu0 0.0
    %231 = vmatprep.mubr.f32.mxu0 0.0
    %232 = vmatmul.mubr.f32.gmra.mxu0 %v165
    %v233 = vpop.f32.mrf.mxu0
    %v234 = vadd.f32 0.0, %v233
    %v235 = vpop.f32.mrf.mxu0
    %236 = vdwg.mxu0
    %237 = vrot.lane.b32.xlu0 %v54, 124
    %v238 = vpop.permute.xlu0 %237
    %v239 = vsel %vm61, %v238, 0
    %241 = vmatprep.subr.mxu0 0.0
    %242 = vmatpush1.msra.mxu0 0.0
    %243 = vmatprep.subr.mxu0 0.0
    %244 = vmatpush1.msra.mxu0 0.0
    %245 = vmatprep.subr.mxu0 0.0
    %246 = vmatpush1.msra.mxu0 0.0
    %247 = vmatprep.subr.mxu0 0.0
    %248 = vmatpush1.msra.mxu0 0.0
    %249 = vmatprep.subr.mxu0 0.0
    %250 = vmatpush1.msra.mxu0 0.0
    %251 = vmatprep.subr.mxu0 0.0
    %252 = vmatpush1.msra.mxu0 0.0
    %253 = vmatprep.subr.mxu0 0.0
    %254 = vmatpush1.msra.mxu0 0.0
    %255 = vmatprep.subr.mxu0 0.0
    %256 = vmatpush1.msra.mxu0 0.0
    %257 = vmatprep.subr.mxu0 0.0
    %258 = vmatpush1.msra.mxu0 0.0
    %259 = vmatprep.subr.mxu0 0.0
    %260 = vmatpush1.msra.mxu0 0.0
    %261 = vmatprep.subr.mxu0 0.0
    %262 = vmatpush1.msra.mxu0 0.0
    %263 = vmatprep.subr.mxu0 0.0
    %264 = vmatpush1.msra.mxu0 0.0
    %265 = vmatprep.subr.mxu0 0.0
    %266 = vmatpush1.msra.mxu0 0.0
    %267 = vmatprep.subr.mxu0 0.0
    %268 = vmatpush1.msra.mxu0 0.0
    %269 = vmatprep.subr.mxu0 0.0
    %270 = vmatpush1.msra.mxu0 0.0
    %271 = vmatprep.subr.mxu0 0.0
    %272 = vmatpush1.msra.mxu0 %v67
    %273 = vmatprep.subr.mxu0 0.0
    %274 = vmatpush2.msra.mxu0 0.0
    %275 = vmatprep.subr.mxu0 0.0
    %276 = vmatpush2.msra.mxu0 0.0
    %277 = vmatprep.subr.mxu0 0.0
    %278 = vmatpush2.msra.mxu0 0.0
    %279 = vmatprep.subr.mxu0 0.0
    %280 = vmatpush2.msra.mxu0 0.0
    %281 = vmatprep.subr.mxu0 0.0
    %282 = vmatpush2.msra.mxu0 0.0
    %283 = vmatprep.subr.mxu0 0.0
    %284 = vmatpush2.msra.mxu0 0.0
    %285 = vmatprep.subr.mxu0 0.0
    %286 = vmatpush2.msra.mxu0 0.0
    %287 = vmatprep.subr.mxu0 0.0
    %288 = vmatpush2.msra.mxu0 0.0
    %289 = vmatprep.subr.mxu0 0.0
    %290 = vmatpush2.msra.mxu0 0.0
    %291 = vmatprep.subr.mxu0 0.0
    %292 = vmatpush2.msra.mxu0 0.0
    %293 = vmatprep.subr.mxu0 0.0
    %294 = vmatpush2.msra.mxu0 0.0
    %295 = vmatprep.subr.mxu0 0.0
    %296 = vmatpush2.msra.mxu0 0.0
    %297 = vmatprep.subr.mxu0 0.0
    %298 = vmatpush2.msra.mxu0 0.0
    %299 = vmatprep.subr.mxu0 0.0
    %300 = vmatpush2.msra.mxu0 0.0
    %301 = vmatprep.subr.mxu0 0.0
    %302 = vmatpush2.msra.mxu0 0.0
    %303 = vmatprep.subr.mxu0 0.0
    %304 = vmatpush2.msra.mxu0 0.0
    %305 = vmatprep.mubr.f32.mxu0 0.0
    %306 = vmatmul.mubr.f32.gmra.mxu0 %v239
    %v307 = vpop.f32.mrf.mxu0
    %v308 = vadd.f32 %v234, %v307
    %v309 = vpop.f32.mrf.mxu0
    %310 = vdwg.mxu0
    %v311 = vadd.f32 %v308, %v43
    %v312 = vmul.f32 %v311, %v60
    %v313 = vtanh.pop %v312
    %v314 = vmul.f32 %v313, 0.5
    %v315 = vadd.f32 %v314, 0.5
    %v316 = vsel %vm59, %v313, %v315
    %v317 = vmul.f32 %v316, %v154
    %319 = vrot.lane.b32.xlu0 %v316, 64
    %v320 = vpop.permute.xlu0 %319
    %v322 = vmul.f32 %v316, %v320
    %324 = vrot.lane.b32.xlu0 %v322, 32
    %v325 = vpop.permute.xlu0 %324
    %v327 = vadd.f32 %v317, %v325
    %v328 = vtanh.pop %v327
    %330 = vrot.lane.b32.xlu0 %v328, 64
    %v331 = vpop.permute.xlu0 %330
    %v333 = vmul.f32 %v316, %v331
    %335 = vrot.lane.b32.xlu0 %v333, 32
    %v336 = vpop.permute.xlu0 %335
    %v337 = vsel %vm164, %v336, 0
    %339 = vmatprep.subr.mxu0 0.0
    %340 = vmatpush1.msra.mxu0 0.0
    %341 = vmatprep.subr.mxu0 0.0
    %342 = vmatpush1.msra.mxu0 0.0
    %343 = vmatprep.subr.mxu0 0.0
    %344 = vmatpush1.msra.mxu0 0.0
    %345 = vmatprep.subr.mxu0 0.0
    %346 = vmatpush1.msra.mxu0 0.0
    %347 = vmatprep.subr.mxu0 0.0
    %348 = vmatpush1.msra.mxu0 0.0
    %349 = vmatprep.subr.mxu0 0.0
    %350 = vmatpush1.msra.mxu0 0.0
    %351 = vmatprep.subr.mxu0 0.0
    %352 = vmatpush1.msra.mxu0 0.0
    %353 = vmatprep.subr.mxu0 0.0
    %354 = vmatpush1.msra.mxu0 0.0
    %355 = vmatprep.subr.mxu0 0.0
    %356 = vmatpush1.msra.mxu0 0.0
    %357 = vmatprep.subr.mxu0 0.0
    %358 = vmatpush1.msra.mxu0 0.0
    %359 = vmatprep.subr.mxu0 0.0
    %360 = vmatpush1.msra.mxu0 0.0
    %361 = vmatprep.subr.mxu0 0.0
    %362 = vmatpush1.msra.mxu0 0.0
    %363 = vmatprep.subr.mxu0 0.0
    %364 = vmatpush1.msra.mxu0 %v34
    %365 = vmatprep.subr.mxu0 0.0
    %366 = vmatpush1.msra.mxu0 %v33
    %367 = vmatprep.subr.mxu0 0.0
    %368 = vmatpush1.msra.mxu0 %v32
    %369 = vmatprep.subr.mxu0 0.0
    %370 = vmatpush1.msra.mxu0 %v31
    %371 = vmatprep.subr.mxu0 0.0
    %372 = vmatpush2.msra.mxu0 0.0
    %373 = vmatprep.subr.mxu0 0.0
    %374 = vmatpush2.msra.mxu0 0.0
    %375 = vmatprep.subr.mxu0 0.0
    %376 = vmatpush2.msra.mxu0 0.0
    %377 = vmatprep.subr.mxu0 0.0
    %378 = vmatpush2.msra.mxu0 0.0
    %379 = vmatprep.subr.mxu0 0.0
    %380 = vmatpush2.msra.mxu0 0.0
    %381 = vmatprep.subr.mxu0 0.0
    %382 = vmatpush2.msra.mxu0 0.0
    %383 = vmatprep.subr.mxu0 0.0
    %384 = vmatpush2.msra.mxu0 0.0
    %385 = vmatprep.subr.mxu0 0.0
    %386 = vmatpush2.msra.mxu0 0.0
    %387 = vmatprep.subr.mxu0 0.0
    %388 = vmatpush2.msra.mxu0 0.0
    %389 = vmatprep.subr.mxu0 0.0
    %390 = vmatpush2.msra.mxu0 0.0
    %391 = vmatprep.subr.mxu0 0.0
    %392 = vmatpush2.msra.mxu0 0.0
    %393 = vmatprep.subr.mxu0 0.0
    %394 = vmatpush2.msra.mxu0 0.0
    %395 = vmatprep.subr.mxu0 0.0
    %396 = vmatpush2.msra.mxu0 0.0
    %397 = vmatprep.subr.mxu0 0.0
    %398 = vmatpush2.msra.mxu0 0.0
    %399 = vmatprep.subr.mxu0 0.0
    %400 = vmatpush2.msra.mxu0 0.0
    %401 = vmatprep.subr.mxu0 0.0
    %402 = vmatpush2.msra.mxu0 0.0
    %403 = vmatprep.mubr.f32.mxu0 0.0
    %404 = vmatmul.mubr.f32.gmra.mxu0 %v337
    %v405 = vpop.f32.mrf.mxu0
    %v406 = vadd.f32 0.0, %v405
    %v407 = vpop.f32.mrf.mxu0
    %408 = vdwg.mxu0
    %409 = vrot.lane.b32.xlu0 %v54, 120
    %v410 = vpop.permute.xlu0 %409
    %v411 = vsel %vm61, %v410, 0
    %413 = vmatprep.subr.mxu0 0.0
    %414 = vmatpush1.msra.mxu0 0.0
    %415 = vmatprep.subr.mxu0 0.0
    %416 = vmatpush1.msra.mxu0 0.0
    %417 = vmatprep.subr.mxu0 0.0
    %418 = vmatpush1.msra.mxu0 0.0
    %419 = vmatprep.subr.mxu0 0.0
    %420 = vmatpush1.msra.mxu0 0.0
    %421 = vmatprep.subr.mxu0 0.0
    %422 = vmatpush1.msra.mxu0 0.0
    %423 = vmatprep.subr.mxu0 0.0
    %424 = vmatpush1.msra.mxu0 0.0
    %425 = vmatprep.subr.mxu0 0.0
    %426 = vmatpush1.msra.mxu0 0.0
    %427 = vmatprep.subr.mxu0 0.0
    %428 = vmatpush1.msra.mxu0 0.0
    %429 = vmatprep.subr.mxu0 0.0
    %430 = vmatpush1.msra.mxu0 0.0
    %431 = vmatprep.subr.mxu0 0.0
    %432 = vmatpush1.msra.mxu0 0.0
    %433 = vmatprep.subr.mxu0 0.0
    %434 = vmatpush1.msra.mxu0 0.0
    %435 = vmatprep.subr.mxu0 0.0
    %436 = vmatpush1.msra.mxu0 0.0
    %437 = vmatprep.subr.mxu0 0.0
    %438 = vmatpush1.msra.mxu0 0.0
    %439 = vmatprep.subr.mxu0 0.0
    %440 = vmatpush1.msra.mxu0 0.0
    %441 = vmatprep.subr.mxu0 0.0
    %442 = vmatpush1.msra.mxu0 0.0
    %443 = vmatprep.subr.mxu0 0.0
    %444 = vmatpush1.msra.mxu0 %v67
    %445 = vmatprep.subr.mxu0 0.0
    %446 = vmatpush2.msra.mxu0 0.0
    %447 = vmatprep.subr.mxu0 0.0
    %448 = vmatpush2.msra.mxu0 0.0
    %449 = vmatprep.subr.mxu0 0.0
    %450 = vmatpush2.msra.mxu0 0.0
    %451 = vmatprep.subr.mxu0 0.0
    %452 = vmatpush2.msra.mxu0 0.0
    %453 = vmatprep.subr.mxu0 0.0
    %454 = vmatpush2.msra.mxu0 0.0
    %455 = vmatprep.subr.mxu0 0.0
    %456 = vmatpush2.msra.mxu0 0.0
    %457 = vmatprep.subr.mxu0 0.0
    %458 = vmatpush2.msra.mxu0 0.0
    %459 = vmatprep.subr.mxu0 0.0
    %460 = vmatpush2.msra.mxu0 0.0
    %461 = vmatprep.subr.mxu0 0.0
    %462 = vmatpush2.msra.mxu0 0.0
    %463 = vmatprep.subr.mxu0 0.0
    %464 = vmatpush2.msra.mxu0 0.0
    %465 = vmatprep.subr.mxu0 0.0
    %466 = vmatpush2.msra.mxu0 0.0
    %467 = vmatprep.subr.mxu0 0.0
    %468 = vmatpush2.msra.mxu0 0.0
    %469 = vmatprep.subr.mxu0 0.0
    %470 = vmatpush2.msra.mxu0 0.0
    %471 = vmatprep.subr.mxu0 0.0
    %472 = vmatpush2.msra.mxu0 0.0
    %473 = vmatprep.subr.mxu0 0.0
    %474 = vmatpush2.msra.mxu0 0.0
    %475 = vmatprep.subr.mxu0 0.0
    %476 = vmatpush2.msra.mxu0 0.0
    %477 = vmatprep.mubr.f32.mxu0 0.0
    %478 = vmatmul.mubr.f32.gmra.mxu0 %v411
    %v479 = vpop.f32.mrf.mxu0
    %v480 = vadd.f32 %v406, %v479
    %v481 = vpop.f32.mrf.mxu0
    %482 = vdwg.mxu0
    %v483 = vadd.f32 %v480, %v43
    %v484 = vmul.f32 %v483, %v60
    %v485 = vtanh.pop %v484
    %v486 = vmul.f32 %v485, 0.5
    %v487 = vadd.f32 %v486, 0.5
    %v488 = vsel %vm59, %v485, %v487
    %v489 = vmul.f32 %v488, %v327
    %491 = vrot.lane.b32.xlu0 %v488, 64
    %v492 = vpop.permute.xlu0 %491
    %v494 = vmul.f32 %v488, %v492
    %496 = vrot.lane.b32.xlu0 %v494, 32
    %v497 = vpop.permute.xlu0 %496
    %v499 = vadd.f32 %v489, %v497
    %v500 = vtanh.pop %v499
    %502 = vrot.lane.b32.xlu0 %v500, 64
    %v503 = vpop.permute.xlu0 %502
    %v505 = vmul.f32 %v488, %v503
    %507 = vrot.lane.b32.xlu0 %v505, 32
    %v508 = vpop.permute.xlu0 %507
    %v509 = vsel %vm164, %v508, 0
    %511 = vmatprep.subr.mxu0 0.0
    %512 = vmatpush1.msra.mxu0 0.0
    %513 = vmatprep.subr.mxu0 0.0
    %514 = vmatpush1.msra.mxu0 0.0
    %515 = vmatprep.subr.mxu0 0.0
    %516 = vmatpush1.msra.mxu0 0.0
    %517 = vmatprep.subr.mxu0 0.0
    %518 = vmatpush1.msra.mxu0 0.0
    %519 = vmatprep.subr.mxu0 0.0
    %520 = vmatpush1.msra.mxu0 0.0
    %521 = vmatprep.subr.mxu0 0.0
    %522 = vmatpush1.msra.mxu0 0.0
    %523 = vmatprep.subr.mxu0 0.0
    %524 = vmatpush1.msra.mxu0 0.0
    %525 = vmatprep.subr.mxu0 0.0
    %526 = vmatpush1.msra.mxu0 0.0
    %527 = vmatprep.subr.mxu0 0.0
    %528 = vmatpush1.msra.mxu0 0.0
    %529 = vmatprep.subr.mxu0 0.0
    %530 = vmatpush1.msra.mxu0 0.0
    %531 = vmatprep.subr.mxu0 0.0
    %532 = vmatpush1.msra.mxu0 0.0
    %533 = vmatprep.subr.mxu0 0.0
    %534 = vmatpush1.msra.mxu0 0.0
    %535 = vmatprep.subr.mxu0 0.0
    %536 = vmatpush1.msra.mxu0 %v34
    %537 = vmatprep.subr.mxu0 0.0
    %538 = vmatpush1.msra.mxu0 %v33
    %539 = vmatprep.subr.mxu0 0.0
    %540 = vmatpush1.msra.mxu0 %v32
    %541 = vmatprep.subr.mxu0 0.0
    %542 = vmatpush1.msra.mxu0 %v31
    %543 = vmatprep.subr.mxu0 0.0
    %544 = vmatpush2.msra.mxu0 0.0
    %545 = vmatprep.subr.mxu0 0.0
    %546 = vmatpush2.msra.mxu0 0.0
    %547 = vmatprep.subr.mxu0 0.0
    %548 = vmatpush2.msra.mxu0 0.0
    %549 = vmatprep.subr.mxu0 0.0
    %550 = vmatpush2.msra.mxu0 0.0
    %551 = vmatprep.subr.mxu0 0.0
    %552 = vmatpush2.msra.mxu0 0.0
    %553 = vmatprep.subr.mxu0 0.0
    %554 = vmatpush2.msra.mxu0 0.0
    %555 = vmatprep.subr.mxu0 0.0
    %556 = vmatpush2.msra.mxu0 0.0
    %557 = vmatprep.subr.mxu0 0.0
    %558 = vmatpush2.msra.mxu0 0.0
    %559 = vmatprep.subr.mxu0 0.0
    %560 = vmatpush2.msra.mxu0 0.0
    %561 = vmatprep.subr.mxu0 0.0
    %562 = vmatpush2.msra.mxu0 0.0
    %563 = vmatprep.subr.mxu0 0.0
    %564 = vmatpush2.msra.mxu0 0.0
    %565 = vmatprep.subr.mxu0 0.0
    %566 = vmatpush2.msra.mxu0 0.0
    %567 = vmatprep.subr.mxu0 0.0
    %568 = vmatpush2.msra.mxu0 0.0
    %569 = vmatprep.subr.mxu0 0.0
    %570 = vmatpush2.msra.mxu0 0.0
    %571 = vmatprep.subr.mxu0 0.0
    %572 = vmatpush2.msra.mxu0 0.0
    %573 = vmatprep.subr.mxu0 0.0
    %574 = vmatpush2.msra.mxu0 0.0
    %575 = vmatprep.mubr.f32.mxu0 0.0
    %576 = vmatmul.mubr.f32.gmra.mxu0 %v509
    %v577 = vpop.f32.mrf.mxu0
    %v578 = vadd.f32 0.0, %v577
    %v579 = vpop.f32.mrf.mxu0
    %580 = vdwg.mxu0
    %581 = vrot.lane.b32.xlu0 %v54, 116
    %v582 = vpop.permute.xlu0 %581
    %v583 = vsel %vm61, %v582, 0
    %585 = vmatprep.subr.mxu0 0.0
    %586 = vmatpush1.msra.mxu0 0.0
    %587 = vmatprep.subr.mxu0 0.0
    %588 = vmatpush1.msra.mxu0 0.0
    %589 = vmatprep.subr.mxu0 0.0
    %590 = vmatpush1.msra.mxu0 0.0
    %591 = vmatprep.subr.mxu0 0.0
    %592 = vmatpush1.msra.mxu0 0.0
    %593 = vmatprep.subr.mxu0 0.0
    %594 = vmatpush1.msra.mxu0 0.0
    %595 = vmatprep.subr.mxu0 0.0
    %596 = vmatpush1.msra.mxu0 0.0
    %597 = vmatprep.subr.mxu0 0.0
    %598 = vmatpush1.msra.mxu0 0.0
    %599 = vmatprep.subr.mxu0 0.0
    %600 = vmatpush1.msra.mxu0 0.0
    %601 = vmatprep.subr.mxu0 0.0
    %602 = vmatpush1.msra.mxu0 0.0
    %603 = vmatprep.subr.mxu0 0.0
    %604 = vmatpush1.msra.mxu0 0.0
    %605 = vmatprep.subr.mxu0 0.0
    %606 = vmatpush1.msra.mxu0 0.0
    %607 = vmatprep.subr.mxu0 0.0
    %608 = vmatpush1.msra.mxu0 0.0
    %609 = vmatprep.subr.mxu0 0.0
    %610 = vmatpush1.msra.mxu0 0.0
    %611 = vmatprep.subr.mxu0 0.0
    %612 = vmatpush1.msra.mxu0 0.0
    %613 = vmatprep.subr.mxu0 0.0
    %614 = vmatpush1.msra.mxu0 0.0
    %615 = vmatprep.subr.mxu0 0.0
    %616 = vmatpush1.msra.mxu0 %v67
    %617 = vmatprep.subr.mxu0 0.0
    %618 = vmatpush2.msra.mxu0 0.0
    %619 = vmatprep.subr.mxu0 0.0
    %620 = vmatpush2.msra.mxu0 0.0
    %621 = vmatprep.subr.mxu0 0.0
    %622 = vmatpush2.msra.mxu0 0.0
    %623 = vmatprep.subr.mxu0 0.0
    %624 = vmatpush2.msra.mxu0 0.0
    %625 = vmatprep.subr.mxu0 0.0
    %626 = vmatpush2.msra.mxu0 0.0
    %627 = vmatprep.subr.mxu0 0.0
    %628 = vmatpush2.msra.mxu0 0.0
    %629 = vmatprep.subr.mxu0 0.0
    %630 = vmatpush2.msra.mxu0 0.0
    %631 = vmatprep.subr.mxu0 0.0
    %632 = vmatpush2.msra.mxu0 0.0
    %633 = vmatprep.subr.mxu0 0.0
    %634 = vmatpush2.msra.mxu0 0.0
    %635 = vmatprep.subr.mxu0 0.0
    %636 = vmatpush2.msra.mxu0 0.0
    %637 = vmatprep.subr.mxu0 0.0
    %638 = vmatpush2.msra.mxu0 0.0
    %639 = vmatprep.subr.mxu0 0.0
    %640 = vmatpush2.msra.mxu0 0.0
    %641 = vmatprep.subr.mxu0 0.0
    %642 = vmatpush2.msra.mxu0 0.0
    %643 = vmatprep.subr.mxu0 0.0
    %644 = vmatpush2.msra.mxu0 0.0
    %645 = vmatprep.subr.mxu0 0.0
    %646 = vmatpush2.msra.mxu0 0.0
    %647 = vmatprep.subr.mxu0 0.0
    %648 = vmatpush2.msra.mxu0 0.0
    %649 = vmatprep.mubr.f32.mxu0 0.0
    %650 = vmatmul.mubr.f32.gmra.mxu0 %v583
    %v651 = vpop.f32.mrf.mxu0
    %v652 = vadd.f32 %v578, %v651
    %v653 = vpop.f32.mrf.mxu0
    %654 = vdwg.mxu0
    %v655 = vadd.f32 %v652, %v43
    %v656 = vmul.f32 %v655, %v60
    %v657 = vtanh.pop %v656
    %v658 = vmul.f32 %v657, 0.5
    %v659 = vadd.f32 %v658, 0.5
    %v660 = vsel %vm59, %v657, %v659
    %v661 = vmul.f32 %v660, %v499
    %663 = vrot.lane.b32.xlu0 %v660, 64
    %v664 = vpop.permute.xlu0 %663
    %v666 = vmul.f32 %v660, %v664
    %668 = vrot.lane.b32.xlu0 %v666, 32
    %v669 = vpop.permute.xlu0 %668
    %v671 = vadd.f32 %v661, %v669
    %v672 = vtanh.pop %v671
    %674 = vrot.lane.b32.xlu0 %v672, 64
    %v675 = vpop.permute.xlu0 %674
    %v677 = vmul.f32 %v660, %v675
    %679 = vrot.lane.b32.xlu0 %v677, 32
    %v680 = vpop.permute.xlu0 %679
    %v681 = vsel %vm164, %v680, 0
    %683 = vmatprep.subr.mxu0 0.0
    %684 = vmatpush1.msra.mxu0 0.0
    %685 = vmatprep.subr.mxu0 0.0
    %686 = vmatpush1.msra.mxu0 0.0
    %687 = vmatprep.subr.mxu0 0.0
    %688 = vmatpush1.msra.mxu0 0.0
    %689 = vmatprep.subr.mxu0 0.0
    %690 = vmatpush1.msra.mxu0 0.0
    %691 = vmatprep.subr.mxu0 0.0
    %692 = vmatpush1.msra.mxu0 0.0
    %693 = vmatprep.subr.mxu0 0.0
    %694 = vmatpush1.msra.mxu0 0.0
    %695 = vmatprep.subr.mxu0 0.0
    %696 = vmatpush1.msra.mxu0 0.0
    %697 = vmatprep.subr.mxu0 0.0
    %698 = vmatpush1.msra.mxu0 0.0
    %699 = vmatprep.subr.mxu0 0.0
    %700 = vmatpush1.msra.mxu0 0.0
    %701 = vmatprep.subr.mxu0 0.0
    %702 = vmatpush1.msra.mxu0 0.0
    %703 = vmatprep.subr.mxu0 0.0
    %704 = vmatpush1.msra.mxu0 0.0
    %705 = vmatprep.subr.mxu0 0.0
    %706 = vmatpush1.msra.mxu0 0.0
    %707 = vmatprep.subr.mxu0 0.0
    %708 = vmatpush1.msra.mxu0 %v34
    %709 = vmatprep.subr.mxu0 0.0
    %710 = vmatpush1.msra.mxu0 %v33
    %711 = vmatprep.subr.mxu0 0.0
    %712 = vmatpush1.msra.mxu0 %v32
    %713 = vmatprep.subr.mxu0 0.0
    %714 = vmatpush1.msra.mxu0 %v31
    %715 = vmatprep.subr.mxu0 0.0
    %716 = vmatpush2.msra.mxu0 0.0
    %717 = vmatprep.subr.mxu0 0.0
    %718 = vmatpush2.msra.mxu0 0.0
    %719 = vmatprep.subr.mxu0 0.0
    %720 = vmatpush2.msra.mxu0 0.0
    %721 = vmatprep.subr.mxu0 0.0
    %722 = vmatpush2.msra.mxu0 0.0
    %723 = vmatprep.subr.mxu0 0.0
    %724 = vmatpush2.msra.mxu0 0.0
    %725 = vmatprep.subr.mxu0 0.0
    %726 = vmatpush2.msra.mxu0 0.0
    %727 = vmatprep.subr.mxu0 0.0
    %728 = vmatpush2.msra.mxu0 0.0
    %729 = vmatprep.subr.mxu0 0.0
    %730 = vmatpush2.msra.mxu0 0.0
    %731 = vmatprep.subr.mxu0 0.0
    %732 = vmatpush2.msra.mxu0 0.0
    %733 = vmatprep.subr.mxu0 0.0
    %734 = vmatpush2.msra.mxu0 0.0
    %735 = vmatprep.subr.mxu0 0.0
    %736 = vmatpush2.msra.mxu0 0.0
    %737 = vmatprep.subr.mxu0 0.0
    %738 = vmatpush2.msra.mxu0 0.0
    %739 = vmatprep.subr.mxu0 0.0
    %740 = vmatpush2.msra.mxu0 0.0
    %741 = vmatprep.subr.mxu0 0.0
    %742 = vmatpush2.msra.mxu0 0.0
    %743 = vmatprep.subr.mxu0 0.0
    %744 = vmatpush2.msra.mxu0 0.0
    %745 = vmatprep.subr.mxu0 0.0
    %746 = vmatpush2.msra.mxu0 0.0
    %747 = vmatprep.mubr.f32.mxu0 0.0
    %748 = vmatmul.mubr.f32.gmra.mxu0 %v681
    %v749 = vpop.f32.mrf.mxu0
    %v750 = vadd.f32 0.0, %v749
    %v751 = vpop.f32.mrf.mxu0
    %752 = vdwg.mxu0
    %753 = vrot.lane.b32.xlu0 %v54, 112
    %v754 = vpop.permute.xlu0 %753
    %v755 = vsel %vm61, %v754, 0
    %757 = vmatprep.subr.mxu0 0.0
    %758 = vmatpush1.msra.mxu0 0.0
    %759 = vmatprep.subr.mxu0 0.0
    %760 = vmatpush1.msra.mxu0 0.0
    %761 = vmatprep.subr.mxu0 0.0
    %762 = vmatpush1.msra.mxu0 0.0
    %763 = vmatprep.subr.mxu0 0.0
    %764 = vmatpush1.msra.mxu0 0.0
    %765 = vmatprep.subr.mxu0 0.0
    %766 = vmatpush1.msra.mxu0 0.0
    %767 = vmatprep.subr.mxu0 0.0
    %768 = vmatpush1.msra.mxu0 0.0
    %769 = vmatprep.subr.mxu0 0.0
    %770 = vmatpush1.msra.mxu0 0.0
    %771 = vmatprep.subr.mxu0 0.0
    %772 = vmatpush1.msra.mxu0 0.0
    %773 = vmatprep.subr.mxu0 0.0
    %774 = vmatpush1.msra.mxu0 0.0
    %775 = vmatprep.subr.mxu0 0.0
    %776 = vmatpush1.msra.mxu0 0.0
    %777 = vmatprep.subr.mxu0 0.0
    %778 = vmatpush1.msra.mxu0 0.0
    %779 = vmatprep.subr.mxu0 0.0
    %780 = vmatpush1.msra.mxu0 0.0
    %781 = vmatprep.subr.mxu0 0.0
    %782 = vmatpush1.msra.mxu0 0.0
    %783 = vmatprep.subr.mxu0 0.0
    %784 = vmatpush1.msra.mxu0 0.0
    %785 = vmatprep.subr.mxu0 0.0
    %786 = vmatpush1.msra.mxu0 0.0
    %787 = vmatprep.subr.mxu0 0.0
    %788 = vmatpush1.msra.mxu0 %v67
    %789 = vmatprep.subr.mxu0 0.0
    %790 = vmatpush2.msra.mxu0 0.0
    %791 = vmatprep.subr.mxu0 0.0
    %792 = vmatpush2.msra.mxu0 0.0
    %793 = vmatprep.subr.mxu0 0.0
    %794 = vmatpush2.msra.mxu0 0.0
    %795 = vmatprep.subr.mxu0 0.0
    %796 = vmatpush2.msra.mxu0 0.0
    %797 = vmatprep.subr.mxu0 0.0
    %798 = vmatpush2.msra.mxu0 0.0
    %799 = vmatprep.subr.mxu0 0.0
    %800 = vmatpush2.msra.mxu0 0.0
    %801 = vmatprep.subr.mxu0 0.0
    %802 = vmatpush2.msra.mxu0 0.0
    %803 = vmatprep.subr.mxu0 0.0
    %804 = vmatpush2.msra.mxu0 0.0
    %805 = vmatprep.subr.mxu0 0.0
    %806 = vmatpush2.msra.mxu0 0.0
    %807 = vmatprep.subr.mxu0 0.0
    %808 = vmatpush2.msra.mxu0 0.0
    %809 = vmatprep.subr.mxu0 0.0
    %810 = vmatpush2.msra.mxu0 0.0
    %811 = vmatprep.subr.mxu0 0.0
    %812 = vmatpush2.msra.mxu0 0.0
    %813 = vmatprep.subr.mxu0 0.0
    %814 = vmatpush2.msra.mxu0 0.0
    %815 = vmatprep.subr.mxu0 0.0
    %816 = vmatpush2.msra.mxu0 0.0
    %817 = vmatprep.subr.mxu0 0.0
    %818 = vmatpush2.msra.mxu0 0.0
    %819 = vmatprep.subr.mxu0 0.0
    %820 = vmatpush2.msra.mxu0 0.0
    %821 = vmatprep.mubr.f32.mxu0 0.0
    %822 = vmatmul.mubr.f32.gmra.mxu0 %v755
    %v823 = vpop.f32.mrf.mxu0
    %v824 = vadd.f32 %v750, %v823
    %v825 = vpop.f32.mrf.mxu0
    %826 = vdwg.mxu0
    %v827 = vadd.f32 %v824, %v43
    %v828 = vmul.f32 %v827, %v60
    %v829 = vtanh.pop %v828
    %v830 = vmul.f32 %v829, 0.5
    %v831 = vadd.f32 %v830, 0.5
    %v832 = vsel %vm59, %v829, %v831
    %v833 = vmul.f32 %v832, %v671
    %835 = vrot.lane.b32.xlu0 %v832, 64
    %v836 = vpop.permute.xlu0 %835
    %v838 = vmul.f32 %v832, %v836
    %840 = vrot.lane.b32.xlu0 %v838, 32
    %v841 = vpop.permute.xlu0 %840
    %v843 = vadd.f32 %v833, %v841
    %v844 = vtanh.pop %v843
    %846 = vrot.lane.b32.xlu0 %v844, 64
    %v847 = vpop.permute.xlu0 %846
    %v849 = vmul.f32 %v832, %v847
    %851 = vrot.lane.b32.xlu0 %v849, 32
    %v852 = vpop.permute.xlu0 %851
    %v853 = vsel %vm164, %v852, 0
    %855 = vmatprep.subr.mxu0 0.0
    %856 = vmatpush1.msra.mxu0 0.0
    %857 = vmatprep.subr.mxu0 0.0
    %858 = vmatpush1.msra.mxu0 0.0
    %859 = vmatprep.subr.mxu0 0.0
    %860 = vmatpush1.msra.mxu0 0.0
    %861 = vmatprep.subr.mxu0 0.0
    %862 = vmatpush1.msra.mxu0 0.0
    %863 = vmatprep.subr.mxu0 0.0
    %864 = vmatpush1.msra.mxu0 0.0
    %865 = vmatprep.subr.mxu0 0.0
    %866 = vmatpush1.msra.mxu0 0.0
    %867 = vmatprep.subr.mxu0 0.0
    %868 = vmatpush1.msra.mxu0 0.0
    %869 = vmatprep.subr.mxu0 0.0
    %870 = vmatpush1.msra.mxu0 0.0
    %871 = vmatprep.subr.mxu0 0.0
    %872 = vmatpush1.msra.mxu0 0.0
    %873 = vmatprep.subr.mxu0 0.0
    %874 = vmatpush1.msra.mxu0 0.0
    %875 = vmatprep.subr.mxu0 0.0
    %876 = vmatpush1.msra.mxu0 0.0
    %877 = vmatprep.subr.mxu0 0.0
    %878 = vmatpush1.msra.mxu0 0.0
    %879 = vmatprep.subr.mxu0 0.0
    %880 = vmatpush1.msra.mxu0 %v34
    %881 = vmatprep.subr.mxu0 0.0
    %882 = vmatpush1.msra.mxu0 %v33
    %883 = vmatprep.subr.mxu0 0.0
    %884 = vmatpush1.msra.mxu0 %v32
    %885 = vmatprep.subr.mxu0 0.0
    %886 = vmatpush1.msra.mxu0 %v31
    %887 = vmatprep.subr.mxu0 0.0
    %888 = vmatpush2.msra.mxu0 0.0
    %889 = vmatprep.subr.mxu0 0.0
    %890 = vmatpush2.msra.mxu0 0.0
    %891 = vmatprep.subr.mxu0 0.0
    %892 = vmatpush2.msra.mxu0 0.0
    %893 = vmatprep.subr.mxu0 0.0
    %894 = vmatpush2.msra.mxu0 0.0
    %895 = vmatprep.subr.mxu0 0.0
    %896 = vmatpush2.msra.mxu0 0.0
    %897 = vmatprep.subr.mxu0 0.0
    %898 = vmatpush2.msra.mxu0 0.0
    %899 = vmatprep.subr.mxu0 0.0
    %900 = vmatpush2.msra.mxu0 0.0
    %901 = vmatprep.subr.mxu0 0.0
    %902 = vmatpush2.msra.mxu0 0.0
    %903 = vmatprep.subr.mxu0 0.0
    %904 = vmatpush2.msra.mxu0 0.0
    %905 = vmatprep.subr.mxu0 0.0
    %906 = vmatpush2.msra.mxu0 0.0
    %907 = vmatprep.subr.mxu0 0.0
    %908 = vmatpush2.msra.mxu0 0.0
    %909 = vmatprep.subr.mxu0 0.0
    %910 = vmatpush2.msra.mxu0 0.0
    %911 = vmatprep.subr.mxu0 0.0
    %912 = vmatpush2.msra.mxu0 0.0
    %913 = vmatprep.subr.mxu0 0.0
    %914 = vmatpush2.msra.mxu0 0.0
    %915 = vmatprep.subr.mxu0 0.0
    %916 = vmatpush2.msra.mxu0 0.0
    %917 = vmatprep.subr.mxu0 0.0
    %918 = vmatpush2.msra.mxu0 0.0
    %919 = vmatprep.mubr.f32.mxu0 0.0
    %920 = vmatmul.mubr.f32.gmra.mxu0 %v853
    %v921 = vpop.f32.mrf.mxu0
    %v922 = vadd.f32 0.0, %v921
    %v923 = vpop.f32.mrf.mxu0
    %924 = vdwg.mxu0
    %925 = vrot.lane.b32.xlu0 %v54, 108
    %v926 = vpop.permute.xlu0 %925
    %v927 = vsel %vm61, %v926, 0
    %929 = vmatprep.subr.mxu0 0.0
    %930 = vmatpush1.msra.mxu0 0.0
    %931 = vmatprep.subr.mxu0 0.0
    %932 = vmatpush1.msra.mxu0 0.0
    %933 = vmatprep.subr.mxu0 0.0
    %934 = vmatpush1.msra.mxu0 0.0
    %935 = vmatprep.subr.mxu0 0.0
    %936 = vmatpush1.msra.mxu0 0.0
    %937 = vmatprep.subr.mxu0 0.0
    %938 = vmatpush1.msra.mxu0 0.0
    %939 = vmatprep.subr.mxu0 0.0
    %940 = vmatpush1.msra.mxu0 0.0
    %941 = vmatprep.subr.mxu0 0.0
    %942 = vmatpush1.msra.mxu0 0.0
    %943 = vmatprep.subr.mxu0 0.0
    %944 = vmatpush1.msra.mxu0 0.0
    %945 = vmatprep.subr.mxu0 0.0
    %946 = vmatpush1.msra.mxu0 0.0
    %947 = vmatprep.subr.mxu0 0.0
    %948 = vmatpush1.msra.mxu0 0.0
    %949 = vmatprep.subr.mxu0 0.0
    %950 = vmatpush1.msra.mxu0 0.0
    %951 = vmatprep.subr.mxu0 0.0
    %952 = vmatpush1.msra.mxu0 0.0
    %953 = vmatprep.subr.mxu0 0.0
    %954 = vmatpush1.msra.mxu0 0.0
    %955 = vmatprep.subr.mxu0 0.0
    %956 = vmatpush1.msra.mxu0 0.0
    %957 = vmatprep.subr.mxu0 0.0
    %958 = vmatpush1.msra.mxu0 0.0
    %959 = vmatprep.subr.mxu0 0.0
    %960 = vmatpush1.msra.mxu0 %v67
    %961 = vmatprep.subr.mxu0 0.0
    %962 = vmatpush2.msra.mxu0 0.0
    %963 = vmatprep.subr.mxu0 0.0
    %964 = vmatpush2.msra.mxu0 0.0
    %965 = vmatprep.subr.mxu0 0.0
    %966 = vmatpush2.msra.mxu0 0.0
    %967 = vmatprep.subr.mxu0 0.0
    %968 = vmatpush2.msra.mxu0 0.0
    %969 = vmatprep.subr.mxu0 0.0
    %970 = vmatpush2.msra.mxu0 0.0
    %971 = vmatprep.subr.mxu0 0.0
    %972 = vmatpush2.msra.mxu0 0.0
    %973 = vmatprep.subr.mxu0 0.0
    %974 = vmatpush2.msra.mxu0 0.0
    %975 = vmatprep.subr.mxu0 0.0
    %976 = vmatpush2.msra.mxu0 0.0
    %977 = vmatprep.subr.mxu0 0.0
    %978 = vmatpush2.msra.mxu0 0.0
    %979 = vmatprep.subr.mxu0 0.0
    %980 = vmatpush2.msra.mxu0 0.0
    %981 = vmatprep.subr.mxu0 0.0
    %982 = vmatpush2.msra.mxu0 0.0
    %983 = vmatprep.subr.mxu0 0.0
    %984 = vmatpush2.msra.mxu0 0.0
    %985 = vmatprep.subr.mxu0 0.0
    %986 = vmatpush2.msra.mxu0 0.0
    %987 = vmatprep.subr.mxu0 0.0
    %988 = vmatpush2.msra.mxu0 0.0
    %989 = vmatprep.subr.mxu0 0.0
    %990 = vmatpush2.msra.mxu0 0.0
    %991 = vmatprep.subr.mxu0 0.0
    %992 = vmatpush2.msra.mxu0 0.0
    %993 = vmatprep.mubr.f32.mxu0 0.0
    %994 = vmatmul.mubr.f32.gmra.mxu0 %v927
    %v995 = vpop.f32.mrf.mxu0
    %v996 = vadd.f32 %v922, %v995
    %v997 = vpop.f32.mrf.mxu0
    %998 = vdwg.mxu0
    %v999 = vadd.f32 %v996, %v43
    %v1000 = vmul.f32 %v999, %v60
    %v1001 = vtanh.pop %v1000
    %v1002 = vmul.f32 %v1001, 0.5
    %v1003 = vadd.f32 %v1002, 0.5
    %v1004 = vsel %vm59, %v1001, %v1003
    %v1005 = vmul.f32 %v1004, %v843
    %1007 = vrot.lane.b32.xlu0 %v1004, 64
    %v1008 = vpop.permute.xlu0 %1007
    %v1010 = vmul.f32 %v1004, %v1008
    %1012 = vrot.lane.b32.xlu0 %v1010, 32
    %v1013 = vpop.permute.xlu0 %1012
    %v1015 = vadd.f32 %v1005, %v1013
    %v1016 = vtanh.pop %v1015
    %1018 = vrot.lane.b32.xlu0 %v1016, 64
    %v1019 = vpop.permute.xlu0 %1018
    %v1021 = vmul.f32 %v1004, %v1019
    %1023 = vrot.lane.b32.xlu0 %v1021, 32
    %v1024 = vpop.permute.xlu0 %1023
    %v1025 = vsel %vm164, %v1024, 0
    %1027 = vmatprep.subr.mxu0 0.0
    %1028 = vmatpush1.msra.mxu0 0.0
    %1029 = vmatprep.subr.mxu0 0.0
    %1030 = vmatpush1.msra.mxu0 0.0
    %1031 = vmatprep.subr.mxu0 0.0
    %1032 = vmatpush1.msra.mxu0 0.0
    %1033 = vmatprep.subr.mxu0 0.0
    %1034 = vmatpush1.msra.mxu0 0.0
    %1035 = vmatprep.subr.mxu0 0.0
    %1036 = vmatpush1.msra.mxu0 0.0
    %1037 = vmatprep.subr.mxu0 0.0
    %1038 = vmatpush1.msra.mxu0 0.0
    %1039 = vmatprep.subr.mxu0 0.0
    %1040 = vmatpush1.msra.mxu0 0.0
    %1041 = vmatprep.subr.mxu0 0.0
    %1042 = vmatpush1.msra.mxu0 0.0
    %1043 = vmatprep.subr.mxu0 0.0
    %1044 = vmatpush1.msra.mxu0 0.0
    %1045 = vmatprep.subr.mxu0 0.0
    %1046 = vmatpush1.msra.mxu0 0.0
    %1047 = vmatprep.subr.mxu0 0.0
    %1048 = vmatpush1.msra.mxu0 0.0
    %1049 = vmatprep.subr.mxu0 0.0
    %1050 = vmatpush1.msra.mxu0 0.0
    %1051 = vmatprep.subr.mxu0 0.0
    %1052 = vmatpush1.msra.mxu0 %v34
    %1053 = vmatprep.subr.mxu0 0.0
    %1054 = vmatpush1.msra.mxu0 %v33
    %1055 = vmatprep.subr.mxu0 0.0
    %1056 = vmatpush1.msra.mxu0 %v32
    %1057 = vmatprep.subr.mxu0 0.0
    %1058 = vmatpush1.msra.mxu0 %v31
    %1059 = vmatprep.subr.mxu0 0.0
    %1060 = vmatpush2.msra.mxu0 0.0
    %1061 = vmatprep.subr.mxu0 0.0
    %1062 = vmatpush2.msra.mxu0 0.0
    %1063 = vmatprep.subr.mxu0 0.0
    %1064 = vmatpush2.msra.mxu0 0.0
    %1065 = vmatprep.subr.mxu0 0.0
    %1066 = vmatpush2.msra.mxu0 0.0
    %1067 = vmatprep.subr.mxu0 0.0
    %1068 = vmatpush2.msra.mxu0 0.0
    %1069 = vmatprep.subr.mxu0 0.0
    %1070 = vmatpush2.msra.mxu0 0.0
    %1071 = vmatprep.subr.mxu0 0.0
    %1072 = vmatpush2.msra.mxu0 0.0
    %1073 = vmatprep.subr.mxu0 0.0
    %1074 = vmatpush2.msra.mxu0 0.0
    %1075 = vmatprep.subr.mxu0 0.0
    %1076 = vmatpush2.msra.mxu0 0.0
    %1077 = vmatprep.subr.mxu0 0.0
    %1078 = vmatpush2.msra.mxu0 0.0
    %1079 = vmatprep.subr.mxu0 0.0
    %1080 = vmatpush2.msra.mxu0 0.0
    %1081 = vmatprep.subr.mxu0 0.0
    %1082 = vmatpush2.msra.mxu0 0.0
    %1083 = vmatprep.subr.mxu0 0.0
    %1084 = vmatpush2.msra.mxu0 0.0
    %1085 = vmatprep.subr.mxu0 0.0
    %1086 = vmatpush2.msra.mxu0 0.0
    %1087 = vmatprep.subr.mxu0 0.0
    %1088 = vmatpush2.msra.mxu0 0.0
    %1089 = vmatprep.subr.mxu0 0.0
    %1090 = vmatpush2.msra.mxu0 0.0
    %1091 = vmatprep.mubr.f32.mxu0 0.0
    %1092 = vmatmul.mubr.f32.gmra.mxu0 %v1025
    %v1093 = vpop.f32.mrf.mxu0
    %v1094 = vadd.f32 0.0, %v1093
    %v1095 = vpop.f32.mrf.mxu0
    %1096 = vdwg.mxu0
    %1097 = vrot.lane.b32.xlu0 %v54, 104
    %v1098 = vpop.permute.xlu0 %1097
    %v1099 = vsel %vm61, %v1098, 0
    %1101 = vmatprep.subr.mxu0 0.0
    %1102 = vmatpush1.msra.mxu0 0.0
    %1103 = vmatprep.subr.mxu0 0.0
    %1104 = vmatpush1.msra.mxu0 0.0
    %1105 = vmatprep.subr.mxu0 0.0
    %1106 = vmatpush1.msra.mxu0 0.0
    %1107 = vmatprep.subr.mxu0 0.0
    %1108 = vmatpush1.msra.mxu0 0.0
    %1109 = vmatprep.subr.mxu0 0.0
    %1110 = vmatpush1.msra.mxu0 0.0
    %1111 = vmatprep.subr.mxu0 0.0
    %1112 = vmatpush1.msra.mxu0 0.0
    %1113 = vmatprep.subr.mxu0 0.0
    %1114 = vmatpush1.msra.mxu0 0.0
    %1115 = vmatprep.subr.mxu0 0.0
    %1116 = vmatpush1.msra.mxu0 0.0
    %1117 = vmatprep.subr.mxu0 0.0
    %1118 = vmatpush1.msra.mxu0 0.0
    %1119 = vmatprep.subr.mxu0 0.0
    %1120 = vmatpush1.msra.mxu0 0.0
    %1121 = vmatprep.subr.mxu0 0.0
    %1122 = vmatpush1.msra.mxu0 0.0
    %1123 = vmatprep.subr.mxu0 0.0
    %1124 = vmatpush1.msra.mxu0 0.0
    %1125 = vmatprep.subr.mxu0 0.0
    %1126 = vmatpush1.msra.mxu0 0.0
    %1127 = vmatprep.subr.mxu0 0.0
    %1128 = vmatpush1.msra.mxu0 0.0
    %1129 = vmatprep.subr.mxu0 0.0
    %1130 = vmatpush1.msra.mxu0 0.0
    %1131 = vmatprep.subr.mxu0 0.0
    %1132 = vmatpush1.msra.mxu0 %v67
    %1133 = vmatprep.subr.mxu0 0.0
    %1134 = vmatpush2.msra.mxu0 0.0
    %1135 = vmatprep.subr.mxu0 0.0
    %1136 = vmatpush2.msra.mxu0 0.0
    %1137 = vmatprep.subr.mxu0 0.0
    %1138 = vmatpush2.msra.mxu0 0.0
    %1139 = vmatprep.subr.mxu0 0.0
    %1140 = vmatpush2.msra.mxu0 0.0
    %1141 = vmatprep.subr.mxu0 0.0
    %1142 = vmatpush2.msra.mxu0 0.0
    %1143 = vmatprep.subr.mxu0 0.0
    %1144 = vmatpush2.msra.mxu0 0.0
    %1145 = vmatprep.subr.mxu0 0.0
    %1146 = vmatpush2.msra.mxu0 0.0
    %1147 = vmatprep.subr.mxu0 0.0
    %1148 = vmatpush2.msra.mxu0 0.0
    %1149 = vmatprep.subr.mxu0 0.0
    %1150 = vmatpush2.msra.mxu0 0.0
    %1151 = vmatprep.subr.mxu0 0.0
    %1152 = vmatpush2.msra.mxu0 0.0
    %1153 = vmatprep.subr.mxu0 0.0
    %1154 = vmatpush2.msra.mxu0 0.0
    %1155 = vmatprep.subr.mxu0 0.0
    %1156 = vmatpush2.msra.mxu0 0.0
    %1157 = vmatprep.subr.mxu0 0.0
    %1158 = vmatpush2.msra.mxu0 0.0
    %1159 = vmatprep.subr.mxu0 0.0
    %1160 = vmatpush2.msra.mxu0 0.0
    %1161 = vmatprep.subr.mxu0 0.0
    %1162 = vmatpush2.msra.mxu0 0.0
    %1163 = vmatprep.subr.mxu0 0.0
    %1164 = vmatpush2.msra.mxu0 0.0
    %1165 = vmatprep.mubr.f32.mxu0 0.0
    %1166 = vmatmul.mubr.f32.gmra.mxu0 %v1099
    %v1167 = vpop.f32.mrf.mxu0
    %v1168 = vadd.f32 %v1094, %v1167
    %v1169 = vpop.f32.mrf.mxu0
    %1170 = vdwg.mxu0
    %v1171 = vadd.f32 %v1168, %v43
    %v1172 = vmul.f32 %v1171, %v60
    %v1173 = vtanh.pop %v1172
    %v1174 = vmul.f32 %v1173, 0.5
    %v1175 = vadd.f32 %v1174, 0.5
    %v1176 = vsel %vm59, %v1173, %v1175
    %v1177 = vmul.f32 %v1176, %v1015
    %1179 = vrot.lane.b32.xlu0 %v1176, 64
    %v1180 = vpop.permute.xlu0 %1179
    %v1182 = vmul.f32 %v1176, %v1180
    %1184 = vrot.lane.b32.xlu0 %v1182, 32
    %v1185 = vpop.permute.xlu0 %1184
    %v1187 = vadd.f32 %v1177, %v1185
    %v1188 = vtanh.pop %v1187
    %1190 = vrot.lane.b32.xlu0 %v1188, 64
    %v1191 = vpop.permute.xlu0 %1190
    %v1193 = vmul.f32 %v1176, %v1191
    %1195 = vrot.lane.b32.xlu0 %v1193, 32
    %v1196 = vpop.permute.xlu0 %1195
    %v1197 = vsel %vm164, %v1196, 0
    %1199 = vmatprep.subr.mxu0 0.0
    %1200 = vmatpush1.msra.mxu0 0.0
    %1201 = vmatprep.subr.mxu0 0.0
    %1202 = vmatpush1.msra.mxu0 0.0
    %1203 = vmatprep.subr.mxu0 0.0
    %1204 = vmatpush1.msra.mxu0 0.0
    %1205 = vmatprep.subr.mxu0 0.0
    %1206 = vmatpush1.msra.mxu0 0.0
    %1207 = vmatprep.subr.mxu0 0.0
    %1208 = vmatpush1.msra.mxu0 0.0
    %1209 = vmatprep.subr.mxu0 0.0
    %1210 = vmatpush1.msra.mxu0 0.0
    %1211 = vmatprep.subr.mxu0 0.0
    %1212 = vmatpush1.msra.mxu0 0.0
    %1213 = vmatprep.subr.mxu0 0.0
    %1214 = vmatpush1.msra.mxu0 0.0
    %1215 = vmatprep.subr.mxu0 0.0
    %1216 = vmatpush1.msra.mxu0 0.0
    %1217 = vmatprep.subr.mxu0 0.0
    %1218 = vmatpush1.msra.mxu0 0.0
    %1219 = vmatprep.subr.mxu0 0.0
    %1220 = vmatpush1.msra.mxu0 0.0
    %1221 = vmatprep.subr.mxu0 0.0
    %1222 = vmatpush1.msra.mxu0 0.0
    %1223 = vmatprep.subr.mxu0 0.0
    %1224 = vmatpush1.msra.mxu0 %v34
    %1225 = vmatprep.subr.mxu0 0.0
    %1226 = vmatpush1.msra.mxu0 %v33
    %1227 = vmatprep.subr.mxu0 0.0
    %1228 = vmatpush1.msra.mxu0 %v32
    %1229 = vmatprep.subr.mxu0 0.0
    %1230 = vmatpush1.msra.mxu0 %v31
    %1231 = vmatprep.subr.mxu0 0.0
    %1232 = vmatpush2.msra.mxu0 0.0
    %1233 = vmatprep.subr.mxu0 0.0
    %1234 = vmatpush2.msra.mxu0 0.0
    %1235 = vmatprep.subr.mxu0 0.0
    %1236 = vmatpush2.msra.mxu0 0.0
    %1237 = vmatprep.subr.mxu0 0.0
    %1238 = vmatpush2.msra.mxu0 0.0
    %1239 = vmatprep.subr.mxu0 0.0
    %1240 = vmatpush2.msra.mxu0 0.0
    %1241 = vmatprep.subr.mxu0 0.0
    %1242 = vmatpush2.msra.mxu0 0.0
    %1243 = vmatprep.subr.mxu0 0.0
    %1244 = vmatpush2.msra.mxu0 0.0
    %1245 = vmatprep.subr.mxu0 0.0
    %1246 = vmatpush2.msra.mxu0 0.0
    %1247 = vmatprep.subr.mxu0 0.0
    %1248 = vmatpush2.msra.mxu0 0.0
    %1249 = vmatprep.subr.mxu0 0.0
    %1250 = vmatpush2.msra.mxu0 0.0
    %1251 = vmatprep.subr.mxu0 0.0
    %1252 = vmatpush2.msra.mxu0 0.0
    %1253 = vmatprep.subr.mxu0 0.0
    %1254 = vmatpush2.msra.mxu0 0.0
    %1255 = vmatprep.subr.mxu0 0.0
    %1256 = vmatpush2.msra.mxu0 0.0
    %1257 = vmatprep.subr.mxu0 0.0
    %1258 = vmatpush2.msra.mxu0 0.0
    %1259 = vmatprep.subr.mxu0 0.0
    %1260 = vmatpush2.msra.mxu0 0.0
    %1261 = vmatprep.subr.mxu0 0.0
    %1262 = vmatpush2.msra.mxu0 0.0
    %1263 = vmatprep.mubr.f32.mxu0 0.0
    %1264 = vmatmul.mubr.f32.gmra.mxu0 %v1197
    %v1265 = vpop.f32.mrf.mxu0
    %v1266 = vadd.f32 0.0, %v1265
    %v1267 = vpop.f32.mrf.mxu0
    %1268 = vdwg.mxu0
    %1269 = vrot.lane.b32.xlu0 %v54, 100
    %v1270 = vpop.permute.xlu0 %1269
    %v1271 = vsel %vm61, %v1270, 0
    %1273 = vmatprep.subr.mxu0 0.0
    %1274 = vmatpush1.msra.mxu0 0.0
    %1275 = vmatprep.subr.mxu0 0.0
    %1276 = vmatpush1.msra.mxu0 0.0
    %1277 = vmatprep.subr.mxu0 0.0
    %1278 = vmatpush1.msra.mxu0 0.0
    %1279 = vmatprep.subr.mxu0 0.0
    %1280 = vmatpush1.msra.mxu0 0.0
    %1281 = vmatprep.subr.mxu0 0.0
    %1282 = vmatpush1.msra.mxu0 0.0
    %1283 = vmatprep.subr.mxu0 0.0
    %1284 = vmatpush1.msra.mxu0 0.0
    %1285 = vmatprep.subr.mxu0 0.0
    %1286 = vmatpush1.msra.mxu0 0.0
    %1287 = vmatprep.subr.mxu0 0.0
    %1288 = vmatpush1.msra.mxu0 0.0
    %1289 = vmatprep.subr.mxu0 0.0
    %1290 = vmatpush1.msra.mxu0 0.0
    %1291 = vmatprep.subr.mxu0 0.0
    %1292 = vmatpush1.msra.mxu0 0.0
    %1293 = vmatprep.subr.mxu0 0.0
    %1294 = vmatpush1.msra.mxu0 0.0
    %1295 = vmatprep.subr.mxu0 0.0
    %1296 = vmatpush1.msra.mxu0 0.0
    %1297 = vmatprep.subr.mxu0 0.0
    %1298 = vmatpush1.msra.mxu0 0.0
    %1299 = vmatprep.subr.mxu0 0.0
    %1300 = vmatpush1.msra.mxu0 0.0
    %1301 = vmatprep.subr.mxu0 0.0
    %1302 = vmatpush1.msra.mxu0 0.0
    %1303 = vmatprep.subr.mxu0 0.0
    %1304 = vmatpush1.msra.mxu0 %v67
    %1305 = vmatprep.subr.mxu0 0.0
    %1306 = vmatpush2.msra.mxu0 0.0
    %1307 = vmatprep.subr.mxu0 0.0
    %1308 = vmatpush2.msra.mxu0 0.0
    %1309 = vmatprep.subr.mxu0 0.0
    %1310 = vmatpush2.msra.mxu0 0.0
    %1311 = vmatprep.subr.mxu0 0.0
    %1312 = vmatpush2.msra.mxu0 0.0
    %1313 = vmatprep.subr.mxu0 0.0
    %1314 = vmatpush2.msra.mxu0 0.0
    %1315 = vmatprep.subr.mxu0 0.0
    %1316 = vmatpush2.msra.mxu0 0.0
    %1317 = vmatprep.subr.mxu0 0.0
    %1318 = vmatpush2.msra.mxu0 0.0
    %1319 = vmatprep.subr.mxu0 0.0
    %1320 = vmatpush2.msra.mxu0 0.0
    %1321 = vmatprep.subr.mxu0 0.0
    %1322 = vmatpush2.msra.mxu0 0.0
    %1323 = vmatprep.subr.mxu0 0.0
    %1324 = vmatpush2.msra.mxu0 0.0
    %1325 = vmatprep.subr.mxu0 0.0
    %1326 = vmatpush2.msra.mxu0 0.0
    %1327 = vmatprep.subr.mxu0 0.0
    %1328 = vmatpush2.msra.mxu0 0.0
    %1329 = vmatprep.subr.mxu0 0.0
    %1330 = vmatpush2.msra.mxu0 0.0
    %1331 = vmatprep.subr.mxu0 0.0
    %1332 = vmatpush2.msra.mxu0 0.0
    %1333 = vmatprep.subr.mxu0 0.0
    %1334 = vmatpush2.msra.mxu0 0.0
    %1335 = vmatprep.subr.mxu0 0.0
    %1336 = vmatpush2.msra.mxu0 0.0
    %1337 = vmatprep.mubr.f32.mxu0 0.0
    %1338 = vmatmul.mubr.f32.gmra.mxu0 %v1271
    %v1339 = vpop.f32.mrf.mxu0
    %v1340 = vadd.f32 %v1266, %v1339
    %v1341 = vpop.f32.mrf.mxu0
    %1342 = vdwg.mxu0
    %v1343 = vadd.f32 %v1340, %v43
    %v1344 = vmul.f32 %v1343, %v60
    %v1345 = vtanh.pop %v1344
    %v1346 = vmul.f32 %v1345, 0.5
    %v1347 = vadd.f32 %v1346, 0.5
    %v1348 = vsel %vm59, %v1345, %v1347
    %v1349 = vmul.f32 %v1348, %v1187
    %1351 = vrot.lane.b32.xlu0 %v1348, 64
    %v1352 = vpop.permute.xlu0 %1351
    %v1354 = vmul.f32 %v1348, %v1352
    %1356 = vrot.lane.b32.xlu0 %v1354, 32
    %v1357 = vpop.permute.xlu0 %1356
    %v1359 = vadd.f32 %v1349, %v1357
    %v1360 = vtanh.pop %v1359
    %1362 = vrot.lane.b32.xlu0 %v1360, 64
    %v1363 = vpop.permute.xlu0 %1362
    %v1365 = vmul.f32 %v1348, %v1363
    %1367 = vrot.lane.b32.xlu0 %v1359, 96
    %v1368 = vpop.permute.xlu0 %1367
    %vm1370 = vcmask 254976
    %1371 = vst.msk [vmem:[#allocation6] sm:$0x3] %vm1370, %v1368
    %1373 = vrot.lane.b32.xlu0 %v1365, 32
    %v1374 = vpop.permute.xlu0 %1373
    %vm1376 = vcmask 253952
    %1377 = vst.msk [vmem:[#allocation2 + $0x7] sm:$0x1] %vm1376, %v1374
    %vm1378 = vcmask 254977
    %1379 = vst.msk [vmem:[#allocation2 + $0xe] sm:$0x2] %vm1378, %v1374
    %v1380 = vsel %vm164, %v1374, 0
    %1382 = vmatprep.subr.mxu0 0.0
    %1383 = vmatpush1.msra.mxu0 0.0
    %1384 = vmatprep.subr.mxu0 0.0
    %1385 = vmatpush1.msra.mxu0 0.0
    %1386 = vmatprep.subr.mxu0 0.0
    %1387 = vmatpush1.msra.mxu0 0.0
    %1388 = vmatprep.subr.mxu0 0.0
    %1389 = vmatpush1.msra.mxu0 0.0
    %1390 = vmatprep.subr.mxu0 0.0
    %1391 = vmatpush1.msra.mxu0 0.0
    %1392 = vmatprep.subr.mxu0 0.0
    %1393 = vmatpush1.msra.mxu0 0.0
    %1394 = vmatprep.subr.mxu0 0.0
    %1395 = vmatpush1.msra.mxu0 0.0
    %1396 = vmatprep.subr.mxu0 0.0
    %1397 = vmatpush1.msra.mxu0 0.0
    %1398 = vmatprep.subr.mxu0 0.0
    %1399 = vmatpush1.msra.mxu0 0.0
    %1400 = vmatprep.subr.mxu0 0.0
    %1401 = vmatpush1.msra.mxu0 0.0
    %1402 = vmatprep.subr.mxu0 0.0
    %1403 = vmatpush1.msra.mxu0 0.0
    %1404 = vmatprep.subr.mxu0 0.0
    %1405 = vmatpush1.msra.mxu0 0.0
    %1406 = vmatprep.subr.mxu0 0.0
    %1407 = vmatpush1.msra.mxu0 %v38
    %1408 = vmatprep.subr.mxu0 0.0
    %1409 = vmatpush1.msra.mxu0 %v37
    %1410 = vmatprep.subr.mxu0 0.0
    %1411 = vmatpush1.msra.mxu0 %v36
    %1412 = vmatprep.subr.mxu0 0.0
    %1413 = vmatpush1.msra.mxu0 %v35
    %1414 = vmatprep.subr.mxu0 0.0
    %1415 = vmatpush2.msra.mxu0 0.0
    %1416 = vmatprep.subr.mxu0 0.0
    %1417 = vmatpush2.msra.mxu0 0.0
    %1418 = vmatprep.subr.mxu0 0.0
    %1419 = vmatpush2.msra.mxu0 0.0
    %1420 = vmatprep.subr.mxu0 0.0
    %1421 = vmatpush2.msra.mxu0 0.0
    %1422 = vmatprep.subr.mxu0 0.0
    %1423 = vmatpush2.msra.mxu0 0.0
    %1424 = vmatprep.subr.mxu0 0.0
    %1425 = vmatpush2.msra.mxu0 0.0
    %1426 = vmatprep.subr.mxu0 0.0
    %1427 = vmatpush2.msra.mxu0 0.0
    %1428 = vmatprep.subr.mxu0 0.0
    %1429 = vmatpush2.msra.mxu0 0.0
    %1430 = vmatprep.subr.mxu0 0.0
    %1431 = vmatpush2.msra.mxu0 0.0
    %1432 = vmatprep.subr.mxu0 0.0
    %1433 = vmatpush2.msra.mxu0 0.0
    %1434 = vmatprep.subr.mxu0 0.0
    %1435 = vmatpush2.msra.mxu0 0.0
    %1436 = vmatprep.subr.mxu0 0.0
    %1437 = vmatpush2.msra.mxu0 0.0
    %1438 = vmatprep.subr.mxu0 0.0
    %1439 = vmatpush2.msra.mxu0 0.0
    %1440 = vmatprep.subr.mxu0 0.0
    %1441 = vmatpush2.msra.mxu0 0.0
    %1442 = vmatprep.subr.mxu0 0.0
    %1443 = vmatpush2.msra.mxu0 0.0
    %1444 = vmatprep.subr.mxu0 0.0
    %1445 = vmatpush2.msra.mxu0 0.0
    %1446 = vmatprep.mubr.f32.mxu0 0.0
    %1447 = vmatmul.mubr.f32.gmra.mxu0 %v1380
    %v1448 = vpop.f32.mrf.mxu0
    %v1449 = vadd.f32 %v48, %v1448
    %v1450 = vpop.f32.mrf.mxu0
    %1451 = vdwg.mxu0
    %v1452 = vmul.f32 %v1449, %v60
    %v1453 = vtanh.pop %v1452
    %v1454 = vmul.f32 %v1453, 0.5
    %v1455 = vadd.f32 %v1454, 0.5
    %v1456 = vsel %vm59, %v1453, %v1455
    %v1457 = vmul.f32 %v1456, %v1359
    %1459 = vrot.lane.b32.xlu0 %v1456, 64
    %v1460 = vpop.permute.xlu0 %1459
    %v1462 = vmul.f32 %v1456, %v1460
    %1464 = vrot.lane.b32.xlu0 %v1462, 32
    %v1465 = vpop.permute.xlu0 %1464
    %v1467 = vadd.f32 %v1457, %v1465
    %v1468 = vtanh.pop %v1467
    %1470 = vrot.lane.b32.xlu0 %v1468, 64
    %v1471 = vpop.permute.xlu0 %1470
    %v1473 = vmul.f32 %v1456, %v1471
    %1475 = vrot.lane.b32.xlu0 %v1473, 32
    %v1476 = vpop.permute.xlu0 %1475
    %1478 = vst.msk [vmem:[#allocation2 + $0x6] sm:$0x1] %vm1376, %v1476
    %1479 = vst.msk [vmem:[#allocation2 + $0xd] sm:$0x2] %vm1378, %v1476
    %v1480 = vsel %vm164, %v1476, 0
    %1482 = vmatprep.subr.mxu0 0.0
    %1483 = vmatpush1.msra.mxu0 0.0
    %1484 = vmatprep.subr.mxu0 0.0
    %1485 = vmatpush1.msra.mxu0 0.0
    %1486 = vmatprep.subr.mxu0 0.0
    %1487 = vmatpush1.msra.mxu0 0.0
    %1488 = vmatprep.subr.mxu0 0.0
    %1489 = vmatpush1.msra.mxu0 0.0
    %1490 = vmatprep.subr.mxu0 0.0
    %1491 = vmatpush1.msra.mxu0 0.0
    %1492 = vmatprep.subr.mxu0 0.0
    %1493 = vmatpush1.msra.mxu0 0.0
    %1494 = vmatprep.subr.mxu0 0.0
    %1495 = vmatpush1.msra.mxu0 0.0
    %1496 = vmatprep.subr.mxu0 0.0
    %1497 = vmatpush1.msra.mxu0 0.0
    %1498 = vmatprep.subr.mxu0 0.0
    %1499 = vmatpush1.msra.mxu0 0.0
    %1500 = vmatprep.subr.mxu0 0.0
    %1501 = vmatpush1.msra.mxu0 0.0
    %1502 = vmatprep.subr.mxu0 0.0
    %1503 = vmatpush1.msra.mxu0 0.0
    %1504 = vmatprep.subr.mxu0 0.0
    %1505 = vmatpush1.msra.mxu0 0.0
    %1506 = vmatprep.subr.mxu0 0.0
    %1507 = vmatpush1.msra.mxu0 %v38
    %1508 = vmatprep.subr.mxu0 0.0
    %1509 = vmatpush1.msra.mxu0 %v37
    %1510 = vmatprep.subr.mxu0 0.0
    %1511 = vmatpush1.msra.mxu0 %v36
    %1512 = vmatprep.subr.mxu0 0.0
    %1513 = vmatpush1.msra.mxu0 %v35
    %1514 = vmatprep.subr.mxu0 0.0
    %1515 = vmatpush2.msra.mxu0 0.0
    %1516 = vmatprep.subr.mxu0 0.0
    %1517 = vmatpush2.msra.mxu0 0.0
    %1518 = vmatprep.subr.mxu0 0.0
    %1519 = vmatpush2.msra.mxu0 0.0
    %1520 = vmatprep.subr.mxu0 0.0
    %1521 = vmatpush2.msra.mxu0 0.0
    %1522 = vmatprep.subr.mxu0 0.0
    %1523 = vmatpush2.msra.mxu0 0.0
    %1524 = vmatprep.subr.mxu0 0.0
    %1525 = vmatpush2.msra.mxu0 0.0
    %1526 = vmatprep.subr.mxu0 0.0
    %1527 = vmatpush2.msra.mxu0 0.0
    %1528 = vmatprep.subr.mxu0 0.0
    %1529 = vmatpush2.msra.mxu0 0.0
    %1530 = vmatprep.subr.mxu0 0.0
    %1531 = vmatpush2.msra.mxu0 0.0
    %1532 = vmatprep.subr.mxu0 0.0
    %1533 = vmatpush2.msra.mxu0 0.0
    %1534 = vmatprep.subr.mxu0 0.0
    %1535 = vmatpush2.msra.mxu0 0.0
    %1536 = vmatprep.subr.mxu0 0.0
    %1537 = vmatpush2.msra.mxu0 0.0
    %1538 = vmatprep.subr.mxu0 0.0
    %1539 = vmatpush2.msra.mxu0 0.0
    %1540 = vmatprep.subr.mxu0 0.0
    %1541 = vmatpush2.msra.mxu0 0.0
    %1542 = vmatprep.subr.mxu0 0.0
    %1543 = vmatpush2.msra.mxu0 0.0
    %1544 = vmatprep.subr.mxu0 0.0
    %1545 = vmatpush2.msra.mxu0 0.0
    %1546 = vmatprep.mubr.f32.mxu0 0.0
    %1547 = vmatmul.mubr.f32.gmra.mxu0 %v1480
    %v1548 = vpop.f32.mrf.mxu0
    %v1549 = vadd.f32 %v48, %v1548
    %v1550 = vpop.f32.mrf.mxu0
    %1551 = vdwg.mxu0
    %v1552 = vmul.f32 %v1549, %v60
    %v1553 = vtanh.pop %v1552
    %v1554 = vmul.f32 %v1553, 0.5
    %v1555 = vadd.f32 %v1554, 0.5
    %v1556 = vsel %vm59, %v1553, %v1555
    %v1557 = vmul.f32 %v1556, %v1467
    %1559 = vrot.lane.b32.xlu0 %v1556, 64
    %v1560 = vpop.permute.xlu0 %1559
    %v1562 = vmul.f32 %v1556, %v1560
    %1564 = vrot.lane.b32.xlu0 %v1562, 32
    %v1565 = vpop.permute.xlu0 %1564
    %v1567 = vadd.f32 %v1557, %v1565
    %v1568 = vtanh.pop %v1567
    %1570 = vrot.lane.b32.xlu0 %v1568, 64
    %v1571 = vpop.permute.xlu0 %1570
    %v1573 = vmul.f32 %v1556, %v1571
    %1575 = vrot.lane.b32.xlu0 %v1573, 32
    %v1576 = vpop.permute.xlu0 %1575
    %1578 = vst.msk [vmem:[#allocation2 + $0x5] sm:$0x1] %vm1376, %v1576
    %1579 = vst.msk [vmem:[#allocation2 + $0xc] sm:$0x2] %vm1378, %v1576
    %v1580 = vsel %vm164, %v1576, 0
    %1582 = vmatprep.subr.mxu0 0.0
    %1583 = vmatpush1.msra.mxu0 0.0
    %1584 = vmatprep.subr.mxu0 0.0
    %1585 = vmatpush1.msra.mxu0 0.0
    %1586 = vmatprep.subr.mxu0 0.0
    %1587 = vmatpush1.msra.mxu0 0.0
    %1588 = vmatprep.subr.mxu0 0.0
    %1589 = vmatpush1.msra.mxu0 0.0
    %1590 = vmatprep.subr.mxu0 0.0
    %1591 = vmatpush1.msra.mxu0 0.0
    %1592 = vmatprep.subr.mxu0 0.0
    %1593 = vmatpush1.msra.mxu0 0.0
    %1594 = vmatprep.subr.mxu0 0.0
    %1595 = vmatpush1.msra.mxu0 0.0
    %1596 = vmatprep.subr.mxu0 0.0
    %1597 = vmatpush1.msra.mxu0 0.0
    %1598 = vmatprep.subr.mxu0 0.0
    %1599 = vmatpush1.msra.mxu0 0.0
    %1600 = vmatprep.subr.mxu0 0.0
    %1601 = vmatpush1.msra.mxu0 0.0
    %1602 = vmatprep.subr.mxu0 0.0
    %1603 = vmatpush1.msra.mxu0 0.0
    %1604 = vmatprep.subr.mxu0 0.0
    %1605 = vmatpush1.msra.mxu0 0.0
    %1606 = vmatprep.subr.mxu0 0.0
    %1607 = vmatpush1.msra.mxu0 %v38
    %1608 = vmatprep.subr.mxu0 0.0
    %1609 = vmatpush1.msra.mxu0 %v37
    %1610 = vmatprep.subr.mxu0 0.0
    %1611 = vmatpush1.msra.mxu0 %v36
    %1612 = vmatprep.subr.mxu0 0.0
    %1613 = vmatpush1.msra.mxu0 %v35
    %1614 = vmatprep.subr.mxu0 0.0
    %1615 = vmatpush2.msra.mxu0 0.0
    %1616 = vmatprep.subr.mxu0 0.0
    %1617 = vmatpush2.msra.mxu0 0.0
    %1618 = vmatprep.subr.mxu0 0.0
    %1619 = vmatpush2.msra.mxu0 0.0
    %1620 = vmatprep.subr.mxu0 0.0
    %1621 = vmatpush2.msra.mxu0 0.0
    %1622 = vmatprep.subr.mxu0 0.0
    %1623 = vmatpush2.msra.mxu0 0.0
    %1624 = vmatprep.subr.mxu0 0.0
    %1625 = vmatpush2.msra.mxu0 0.0
    %1626 = vmatprep.subr.mxu0 0.0
    %1627 = vmatpush2.msra.mxu0 0.0
    %1628 = vmatprep.subr.mxu0 0.0
    %1629 = vmatpush2.msra.mxu0 0.0
    %1630 = vmatprep.subr.mxu0 0.0
    %1631 = vmatpush2.msra.mxu0 0.0
    %1632 = vmatprep.subr.mxu0 0.0
    %1633 = vmatpush2.msra.mxu0 0.0
    %1634 = vmatprep.subr.mxu0 0.0
    %1635 = vmatpush2.msra.mxu0 0.0
    %1636 = vmatprep.subr.mxu0 0.0
    %1637 = vmatpush2.msra.mxu0 0.0
    %1638 = vmatprep.subr.mxu0 0.0
    %1639 = vmatpush2.msra.mxu0 0.0
    %1640 = vmatprep.subr.mxu0 0.0
    %1641 = vmatpush2.msra.mxu0 0.0
    %1642 = vmatprep.subr.mxu0 0.0
    %1643 = vmatpush2.msra.mxu0 0.0
    %1644 = vmatprep.subr.mxu0 0.0
    %1645 = vmatpush2.msra.mxu0 0.0
    %1646 = vmatprep.mubr.f32.mxu0 0.0
    %1647 = vmatmul.mubr.f32.gmra.mxu0 %v1580
    %v1648 = vpop.f32.mrf.mxu0
    %v1649 = vadd.f32 %v48, %v1648
    %v1650 = vpop.f32.mrf.mxu0
    %1651 = vdwg.mxu0
    %v1652 = vmul.f32 %v1649, %v60
    %v1653 = vtanh.pop %v1652
    %v1654 = vmul.f32 %v1653, 0.5
    %v1655 = vadd.f32 %v1654, 0.5
    %v1656 = vsel %vm59, %v1653, %v1655
    %v1657 = vmul.f32 %v1656, %v1567
    %1659 = vrot.lane.b32.xlu0 %v1656, 64
    %v1660 = vpop.permute.xlu0 %1659
    %v1662 = vmul.f32 %v1656, %v1660
    %1664 = vrot.lane.b32.xlu0 %v1662, 32
    %v1665 = vpop.permute.xlu0 %1664
    %v1667 = vadd.f32 %v1657, %v1665
    %v1668 = vtanh.pop %v1667
    %1670 = vrot.lane.b32.xlu0 %v1668, 64
    %v1671 = vpop.permute.xlu0 %1670
    %v1673 = vmul.f32 %v1656, %v1671
    %1675 = vrot.lane.b32.xlu0 %v1673, 32
    %v1676 = vpop.permute.xlu0 %1675
    %1678 = vst.msk [vmem:[#allocation2 + $0x4] sm:$0x1] %vm1376, %v1676
    %1679 = vst.msk [vmem:[#allocation2 + $0xb] sm:$0x2] %vm1378, %v1676
    %v1680 = vsel %vm164, %v1676, 0
    %1682 = vmatprep.subr.mxu0 0.0
    %1683 = vmatpush1.msra.mxu0 0.0
    %1684 = vmatprep.subr.mxu0 0.0
    %1685 = vmatpush1.msra.mxu0 0.0
    %1686 = vmatprep.subr.mxu0 0.0
    %1687 = vmatpush1.msra.mxu0 0.0
    %1688 = vmatprep.subr.mxu0 0.0
    %1689 = vmatpush1.msra.mxu0 0.0
    %1690 = vmatprep.subr.mxu0 0.0
    %1691 = vmatpush1.msra.mxu0 0.0
    %1692 = vmatprep.subr.mxu0 0.0
    %1693 = vmatpush1.msra.mxu0 0.0
    %1694 = vmatprep.subr.mxu0 0.0
    %1695 = vmatpush1.msra.mxu0 0.0
    %1696 = vmatprep.subr.mxu0 0.0
    %1697 = vmatpush1.msra.mxu0 0.0
    %1698 = vmatprep.subr.mxu0 0.0
    %1699 = vmatpush1.msra.mxu0 0.0
    %1700 = vmatprep.subr.mxu0 0.0
    %1701 = vmatpush1.msra.mxu0 0.0
    %1702 = vmatprep.subr.mxu0 0.0
    %1703 = vmatpush1.msra.mxu0 0.0
    %1704 = vmatprep.subr.mxu0 0.0
    %1705 = vmatpush1.msra.mxu0 0.0
    %1706 = vmatprep.subr.mxu0 0.0
    %1707 = vmatpush1.msra.mxu0 %v38
    %1708 = vmatprep.subr.mxu0 0.0
    %1709 = vmatpush1.msra.mxu0 %v37
    %1710 = vmatprep.subr.mxu0 0.0
    %1711 = vmatpush1.msra.mxu0 %v36
    %1712 = vmatprep.subr.mxu0 0.0
    %1713 = vmatpush1.msra.mxu0 %v35
    %1714 = vmatprep.subr.mxu0 0.0
    %1715 = vmatpush2.msra.mxu0 0.0
    %1716 = vmatprep.subr.mxu0 0.0
    %1717 = vmatpush2.msra.mxu0 0.0
    %1718 = vmatprep.subr.mxu0 0.0
    %1719 = vmatpush2.msra.mxu0 0.0
    %1720 = vmatprep.subr.mxu0 0.0
    %1721 = vmatpush2.msra.mxu0 0.0
    %1722 = vmatprep.subr.mxu0 0.0
    %1723 = vmatpush2.msra.mxu0 0.0
    %1724 = vmatprep.subr.mxu0 0.0
    %1725 = vmatpush2.msra.mxu0 0.0
    %1726 = vmatprep.subr.mxu0 0.0
    %1727 = vmatpush2.msra.mxu0 0.0
    %1728 = vmatprep.subr.mxu0 0.0
    %1729 = vmatpush2.msra.mxu0 0.0
    %1730 = vmatprep.subr.mxu0 0.0
    %1731 = vmatpush2.msra.mxu0 0.0
    %1732 = vmatprep.subr.mxu0 0.0
    %1733 = vmatpush2.msra.mxu0 0.0
    %1734 = vmatprep.subr.mxu0 0.0
    %1735 = vmatpush2.msra.mxu0 0.0
    %1736 = vmatprep.subr.mxu0 0.0
    %1737 = vmatpush2.msra.mxu0 0.0
    %1738 = vmatprep.subr.mxu0 0.0
    %1739 = vmatpush2.msra.mxu0 0.0
    %1740 = vmatprep.subr.mxu0 0.0
    %1741 = vmatpush2.msra.mxu0 0.0
    %1742 = vmatprep.subr.mxu0 0.0
    %1743 = vmatpush2.msra.mxu0 0.0
    %1744 = vmatprep.subr.mxu0 0.0
    %1745 = vmatpush2.msra.mxu0 0.0
    %1746 = vmatprep.mubr.f32.mxu0 0.0
    %1747 = vmatmul.mubr.f32.gmra.mxu0 %v1680
    %v1748 = vpop.f32.mrf.mxu0
    %v1749 = vadd.f32 %v48, %v1748
    %v1750 = vpop.f32.mrf.mxu0
    %1751 = vdwg.mxu0
    %v1752 = vmul.f32 %v1749, %v60
    %v1753 = vtanh.pop %v1752
    %v1754 = vmul.f32 %v1753, 0.5
    %v1755 = vadd.f32 %v1754, 0.5
    %v1756 = vsel %vm59, %v1753, %v1755
    %v1757 = vmul.f32 %v1756, %v1667
    %1759 = vrot.lane.b32.xlu0 %v1756, 64
    %v1760 = vpop.permute.xlu0 %1759
    %v1762 = vmul.f32 %v1756, %v1760
    %1764 = vrot.lane.b32.xlu0 %v1762, 32
    %v1765 = vpop.permute.xlu0 %1764
    %v1767 = vadd.f32 %v1757, %v1765
    %v1768 = vtanh.pop %v1767
    %1770 = vrot.lane.b32.xlu0 %v1768, 64
    %v1771 = vpop.permute.xlu0 %1770
    %v1773 = vmul.f32 %v1756, %v1771
    %1775 = vrot.lane.b32.xlu0 %v1773, 32
    %v1776 = vpop.permute.xlu0 %1775
    %1778 = vst.msk [vmem:[#allocation2 + $0x3] sm:$0x1] %vm1376, %v1776
    %1779 = vst.msk [vmem:[#allocation2 + $0xa] sm:$0x2] %vm1378, %v1776
    %v1780 = vsel %vm164, %v1776, 0
    %1782 = vmatprep.subr.mxu0 0.0
    %1783 = vmatpush1.msra.mxu0 0.0
    %1784 = vmatprep.subr.mxu0 0.0
    %1785 = vmatpush1.msra.mxu0 0.0
    %1786 = vmatprep.subr.mxu0 0.0
    %1787 = vmatpush1.msra.mxu0 0.0
    %1788 = vmatprep.subr.mxu0 0.0
    %1789 = vmatpush1.msra.mxu0 0.0
    %1790 = vmatprep.subr.mxu0 0.0
    %1791 = vmatpush1.msra.mxu0 0.0
    %1792 = vmatprep.subr.mxu0 0.0
    %1793 = vmatpush1.msra.mxu0 0.0
    %1794 = vmatprep.subr.mxu0 0.0
    %1795 = vmatpush1.msra.mxu0 0.0
    %1796 = vmatprep.subr.mxu0 0.0
    %1797 = vmatpush1.msra.mxu0 0.0
    %1798 = vmatprep.subr.mxu0 0.0
    %1799 = vmatpush1.msra.mxu0 0.0
    %1800 = vmatprep.subr.mxu0 0.0
    %1801 = vmatpush1.msra.mxu0 0.0
    %1802 = vmatprep.subr.mxu0 0.0
    %1803 = vmatpush1.msra.mxu0 0.0
    %1804 = vmatprep.subr.mxu0 0.0
    %1805 = vmatpush1.msra.mxu0 0.0
    %1806 = vmatprep.subr.mxu0 0.0
    %1807 = vmatpush1.msra.mxu0 %v38
    %1808 = vmatprep.subr.mxu0 0.0
    %1809 = vmatpush1.msra.mxu0 %v37
    %1810 = vmatprep.subr.mxu0 0.0
    %1811 = vmatpush1.msra.mxu0 %v36
    %1812 = vmatprep.subr.mxu0 0.0
    %1813 = vmatpush1.msra.mxu0 %v35
    %1814 = vmatprep.subr.mxu0 0.0
    %1815 = vmatpush2.msra.mxu0 0.0
    %1816 = vmatprep.subr.mxu0 0.0
    %1817 = vmatpush2.msra.mxu0 0.0
    %1818 = vmatprep.subr.mxu0 0.0
    %1819 = vmatpush2.msra.mxu0 0.0
    %1820 = vmatprep.subr.mxu0 0.0
    %1821 = vmatpush2.msra.mxu0 0.0
    %1822 = vmatprep.subr.mxu0 0.0
    %1823 = vmatpush2.msra.mxu0 0.0
    %1824 = vmatprep.subr.mxu0 0.0
    %1825 = vmatpush2.msra.mxu0 0.0
    %1826 = vmatprep.subr.mxu0 0.0
    %1827 = vmatpush2.msra.mxu0 0.0
    %1828 = vmatprep.subr.mxu0 0.0
    %1829 = vmatpush2.msra.mxu0 0.0
    %1830 = vmatprep.subr.mxu0 0.0
    %1831 = vmatpush2.msra.mxu0 0.0
    %1832 = vmatprep.subr.mxu0 0.0
    %1833 = vmatpush2.msra.mxu0 0.0
    %1834 = vmatprep.subr.mxu0 0.0
    %1835 = vmatpush2.msra.mxu0 0.0
    %1836 = vmatprep.subr.mxu0 0.0
    %1837 = vmatpush2.msra.mxu0 0.0
    %1838 = vmatprep.subr.mxu0 0.0
    %1839 = vmatpush2.msra.mxu0 0.0
    %1840 = vmatprep.subr.mxu0 0.0
    %1841 = vmatpush2.msra.mxu0 0.0
    %1842 = vmatprep.subr.mxu0 0.0
    %1843 = vmatpush2.msra.mxu0 0.0
    %1844 = vmatprep.subr.mxu0 0.0
    %1845 = vmatpush2.msra.mxu0 0.0
    %1846 = vmatprep.mubr.f32.mxu0 0.0
    %1847 = vmatmul.mubr.f32.gmra.mxu0 %v1780
    %v1848 = vpop.f32.mrf.mxu0
    %v1849 = vadd.f32 %v48, %v1848
    %v1850 = vpop.f32.mrf.mxu0
    %1851 = vdwg.mxu0
    %v1852 = vmul.f32 %v1849, %v60
    %v1853 = vtanh.pop %v1852
    %v1854 = vmul.f32 %v1853, 0.5
    %v1855 = vadd.f32 %v1854, 0.5
    %v1856 = vsel %vm59, %v1853, %v1855
    %v1857 = vmul.f32 %v1856, %v1767
    %1859 = vrot.lane.b32.xlu0 %v1856, 64
    %v1860 = vpop.permute.xlu0 %1859
    %v1862 = vmul.f32 %v1856, %v1860
    %1864 = vrot.lane.b32.xlu0 %v1862, 32
    %v1865 = vpop.permute.xlu0 %1864
    %v1867 = vadd.f32 %v1857, %v1865
    %v1868 = vtanh.pop %v1867
    %1870 = vrot.lane.b32.xlu0 %v1868, 64
    %v1871 = vpop.permute.xlu0 %1870
    %v1873 = vmul.f32 %v1856, %v1871
    %1875 = vrot.lane.b32.xlu0 %v1873, 32
    %v1876 = vpop.permute.xlu0 %1875
    %1878 = vst.msk [vmem:[#allocation2 + $0x2] sm:$0x1] %vm1376, %v1876
    %1879 = vst.msk [vmem:[#allocation2 + $0x9] sm:$0x2] %vm1378, %v1876
    %v1880 = vsel %vm164, %v1876, 0
    %1882 = vmatprep.subr.mxu0 0.0
    %1883 = vmatpush1.msra.mxu0 0.0
    %1884 = vmatprep.subr.mxu0 0.0
    %1885 = vmatpush1.msra.mxu0 0.0
    %1886 = vmatprep.subr.mxu0 0.0
    %1887 = vmatpush1.msra.mxu0 0.0
    %1888 = vmatprep.subr.mxu0 0.0
    %1889 = vmatpush1.msra.mxu0 0.0
    %1890 = vmatprep.subr.mxu0 0.0
    %1891 = vmatpush1.msra.mxu0 0.0
    %1892 = vmatprep.subr.mxu0 0.0
    %1893 = vmatpush1.msra.mxu0 0.0
    %1894 = vmatprep.subr.mxu0 0.0
    %1895 = vmatpush1.msra.mxu0 0.0
    %1896 = vmatprep.subr.mxu0 0.0
    %1897 = vmatpush1.msra.mxu0 0.0
    %1898 = vmatprep.subr.mxu0 0.0
    %1899 = vmatpush1.msra.mxu0 0.0
    %1900 = vmatprep.subr.mxu0 0.0
    %1901 = vmatpush1.msra.mxu0 0.0
    %1902 = vmatprep.subr.mxu0 0.0
    %1903 = vmatpush1.msra.mxu0 0.0
    %1904 = vmatprep.subr.mxu0 0.0
    %1905 = vmatpush1.msra.mxu0 0.0
    %1906 = vmatprep.subr.mxu0 0.0
    %1907 = vmatpush1.msra.mxu0 %v38
    %1908 = vmatprep.subr.mxu0 0.0
    %1909 = vmatpush1.msra.mxu0 %v37
    %1910 = vmatprep.subr.mxu0 0.0
    %1911 = vmatpush1.msra.mxu0 %v36
    %1912 = vmatprep.subr.mxu0 0.0
    %1913 = vmatpush1.msra.mxu0 %v35
    %1914 = vmatprep.subr.mxu0 0.0
    %1915 = vmatpush2.msra.mxu0 0.0
    %1916 = vmatprep.subr.mxu0 0.0
    %1917 = vmatpush2.msra.mxu0 0.0
    %1918 = vmatprep.subr.mxu0 0.0
    %1919 = vmatpush2.msra.mxu0 0.0
    %1920 = vmatprep.subr.mxu0 0.0
    %1921 = vmatpush2.msra.mxu0 0.0
    %1922 = vmatprep.subr.mxu0 0.0
    %1923 = vmatpush2.msra.mxu0 0.0
    %1924 = vmatprep.subr.mxu0 0.0
    %1925 = vmatpush2.msra.mxu0 0.0
    %1926 = vmatprep.subr.mxu0 0.0
    %1927 = vmatpush2.msra.mxu0 0.0
    %1928 = vmatprep.subr.mxu0 0.0
    %1929 = vmatpush2.msra.mxu0 0.0
    %1930 = vmatprep.subr.mxu0 0.0
    %1931 = vmatpush2.msra.mxu0 0.0
    %1932 = vmatprep.subr.mxu0 0.0
    %1933 = vmatpush2.msra.mxu0 0.0
    %1934 = vmatprep.subr.mxu0 0.0
    %1935 = vmatpush2.msra.mxu0 0.0
    %1936 = vmatprep.subr.mxu0 0.0
    %1937 = vmatpush2.msra.mxu0 0.0
    %1938 = vmatprep.subr.mxu0 0.0
    %1939 = vmatpush2.msra.mxu0 0.0
    %1940 = vmatprep.subr.mxu0 0.0
    %1941 = vmatpush2.msra.mxu0 0.0
    %1942 = vmatprep.subr.mxu0 0.0
    %1943 = vmatpush2.msra.mxu0 0.0
    %1944 = vmatprep.subr.mxu0 0.0
    %1945 = vmatpush2.msra.mxu0 0.0
    %1946 = vmatprep.mubr.f32.mxu0 0.0
    %1947 = vmatmul.mubr.f32.gmra.mxu0 %v1880
    %v1948 = vpop.f32.mrf.mxu0
    %v1949 = vadd.f32 %v48, %v1948
    %v1950 = vpop.f32.mrf.mxu0
    %1951 = vdwg.mxu0
    %v1952 = vmul.f32 %v1949, %v60
    %v1953 = vtanh.pop %v1952
    %v1954 = vmul.f32 %v1953, 0.5
    %v1955 = vadd.f32 %v1954, 0.5
    %v1956 = vsel %vm59, %v1953, %v1955
    %v1957 = vmul.f32 %v1956, %v1867
    %1959 = vrot.lane.b32.xlu0 %v1956, 64
    %v1960 = vpop.permute.xlu0 %1959
    %v1962 = vmul.f32 %v1956, %v1960
    %1964 = vrot.lane.b32.xlu0 %v1962, 32
    %v1965 = vpop.permute.xlu0 %1964
    %v1967 = vadd.f32 %v1957, %v1965
    %v1968 = vtanh.pop %v1967
    %1970 = vrot.lane.b32.xlu0 %v1968, 64
    %v1971 = vpop.permute.xlu0 %1970
    %v1973 = vmul.f32 %v1956, %v1971
    %1975 = vrot.lane.b32.xlu0 %v1973, 32
    %v1976 = vpop.permute.xlu0 %1975
    %1978 = vst.msk [vmem:[#allocation2 + $0x1] sm:$0x1] %vm1376, %v1976
    %1979 = vst.msk [vmem:[#allocation2 + $0x8] sm:$0x2] %vm1378, %v1976
    %v1980 = vsel %vm164, %v1976, 0
    %1982 = vmatprep.subr.mxu0 0.0
    %1983 = vmatpush1.msra.mxu0 0.0
    %1984 = vmatprep.subr.mxu0 0.0
    %1985 = vmatpush1.msra.mxu0 0.0
    %1986 = vmatprep.subr.mxu0 0.0
    %1987 = vmatpush1.msra.mxu0 0.0
    %1988 = vmatprep.subr.mxu0 0.0
    %1989 = vmatpush1.msra.mxu0 0.0
    %1990 = vmatprep.subr.mxu0 0.0
    %1991 = vmatpush1.msra.mxu0 0.0
    %1992 = vmatprep.subr.mxu0 0.0
    %1993 = vmatpush1.msra.mxu0 0.0
    %1994 = vmatprep.subr.mxu0 0.0
    %1995 = vmatpush1.msra.mxu0 0.0
    %1996 = vmatprep.subr.mxu0 0.0
    %1997 = vmatpush1.msra.mxu0 0.0
    %1998 = vmatprep.subr.mxu0 0.0
    %1999 = vmatpush1.msra.mxu0 0.0
    %2000 = vmatprep.subr.mxu0 0.0
    %2001 = vmatpush1.msra.mxu0 0.0
    %2002 = vmatprep.subr.mxu0 0.0
    %2003 = vmatpush1.msra.mxu0 0.0
    %2004 = vmatprep.subr.mxu0 0.0
    %2005 = vmatpush1.msra.mxu0 0.0
    %2006 = vmatprep.subr.mxu0 0.0
    %2007 = vmatpush1.msra.mxu0 %v38
    %2008 = vmatprep.subr.mxu0 0.0
    %2009 = vmatpush1.msra.mxu0 %v37
    %2010 = vmatprep.subr.mxu0 0.0
    %2011 = vmatpush1.msra.mxu0 %v36
    %2012 = vmatprep.subr.mxu0 0.0
    %2013 = vmatpush1.msra.mxu0 %v35
    %2014 = vmatprep.subr.mxu0 0.0
    %2015 = vmatpush2.msra.mxu0 0.0
    %2016 = vmatprep.subr.mxu0 0.0
    %2017 = vmatpush2.msra.mxu0 0.0
    %2018 = vmatprep.subr.mxu0 0.0
    %2019 = vmatpush2.msra.mxu0 0.0
    %2020 = vmatprep.subr.mxu0 0.0
    %2021 = vmatpush2.msra.mxu0 0.0
    %2022 = vmatprep.subr.mxu0 0.0
    %2023 = vmatpush2.msra.mxu0 0.0
    %2024 = vmatprep.subr.mxu0 0.0
    %2025 = vmatpush2.msra.mxu0 0.0
    %2026 = vmatprep.subr.mxu0 0.0
    %2027 = vmatpush2.msra.mxu0 0.0
    %2028 = vmatprep.subr.mxu0 0.0
    %2029 = vmatpush2.msra.mxu0 0.0
    %2030 = vmatprep.subr.mxu0 0.0
    %2031 = vmatpush2.msra.mxu0 0.0
    %2032 = vmatprep.subr.mxu0 0.0
    %2033 = vmatpush2.msra.mxu0 0.0
    %2034 = vmatprep.subr.mxu0 0.0
    %2035 = vmatpush2.msra.mxu0 0.0
    %2036 = vmatprep.subr.mxu0 0.0
    %2037 = vmatpush2.msra.mxu0 0.0
    %2038 = vmatprep.subr.mxu0 0.0
    %2039 = vmatpush2.msra.mxu0 0.0
    %2040 = vmatprep.subr.mxu0 0.0
    %2041 = vmatpush2.msra.mxu0 0.0
    %2042 = vmatprep.subr.mxu0 0.0
    %2043 = vmatpush2.msra.mxu0 0.0
    %2044 = vmatprep.subr.mxu0 0.0
    %2045 = vmatpush2.msra.mxu0 0.0
    %2046 = vmatprep.mubr.f32.mxu0 0.0
    %2047 = vmatmul.mubr.f32.gmra.mxu0 %v1980
    %v2048 = vpop.f32.mrf.mxu0
    %v2049 = vadd.f32 %v48, %v2048
    %v2050 = vpop.f32.mrf.mxu0
    %2051 = vdwg.mxu0
    %v2052 = vmul.f32 %v2049, %v60
    %v2053 = vtanh.pop %v2052
    %v2054 = vmul.f32 %v2053, 0.5
    %v2055 = vadd.f32 %v2054, 0.5
    %v2056 = vsel %vm59, %v2053, %v2055
    %v2057 = vmul.f32 %v2056, %v1967
    %2059 = vrot.lane.b32.xlu0 %v2056, 64
    %v2060 = vpop.permute.xlu0 %2059
    %v2062 = vmul.f32 %v2056, %v2060
    %2064 = vrot.lane.b32.xlu0 %v2062, 32
    %v2065 = vpop.permute.xlu0 %2064
    %v2067 = vadd.f32 %v2057, %v2065
    %v2068 = vtanh.pop %v2067
    %2070 = vrot.lane.b32.xlu0 %v2068, 64
    %v2071 = vpop.permute.xlu0 %2070
    %v2073 = vmul.f32 %v2056, %v2071
    %2075 = vrot.lane.b32.xlu0 %v2073, 32
    %v2076 = vpop.permute.xlu0 %2075
    %2078 = vst.msk [vmem:[#allocation2] sm:$0x1] %vm1376, %v2076
    %2079 = vst.msk [vmem:[#allocation2 + $0x7] sm:$0x2] %vm1378, %v2076
    %v2080 = vld [vmem:[#allocation2] sm:$0xff]
    %v2081 = vld [vmem:[#allocation2 + $0x8] sm:$0xff]
    %v2082 = vlaneseq
    %v2083 = vshrl.u32 %v2082, 7
    %v2084 = vsub.s32 0, %v2083
    %v2085 = vrot.slane %v49, %v2084
    %v2087 = vsel %vm164, %v2080, 0
    %v2090 = vsel %vm164, %v2081, 0
    %2092 = vmatprep.subr.mxu0 0.0
    %2093 = vmatpush1.msra.mxu0 0.0
    %2094 = vmatprep.subr.mxu0 0.0
    %2095 = vmatpush1.msra.mxu0 0.0
    %2096 = vmatprep.subr.mxu0 0.0
    %2097 = vmatpush1.msra.mxu0 0.0
    %2098 = vmatprep.subr.mxu0 0.0
    %2099 = vmatpush1.msra.mxu0 0.0
    %2100 = vmatprep.subr.mxu0 0.0
    %2101 = vmatpush1.msra.mxu0 0.0
    %2102 = vmatprep.subr.mxu0 0.0
    %2103 = vmatpush1.msra.mxu0 0.0
    %2104 = vmatprep.subr.mxu0 0.0
    %2105 = vmatpush1.msra.mxu0 0.0
    %2106 = vmatprep.subr.mxu0 0.0
    %2107 = vmatpush1.msra.mxu0 0.0
    %2108 = vmatprep.subr.mxu0 0.0
    %2109 = vmatpush1.msra.mxu0 0.0
    %2110 = vmatprep.subr.mxu0 0.0
    %2111 = vmatpush1.msra.mxu0 0.0
    %2112 = vmatprep.subr.mxu0 0.0
    %2113 = vmatpush1.msra.mxu0 0.0
    %2114 = vmatprep.subr.mxu0 0.0
    %2115 = vmatpush1.msra.mxu0 0.0
    %2116 = vmatprep.subr.mxu0 0.0
    %2117 = vmatpush1.msra.mxu0 %v53
    %2118 = vmatprep.subr.mxu0 0.0
    %2119 = vmatpush1.msra.mxu0 %v52
    %2120 = vmatprep.subr.mxu0 0.0
    %2121 = vmatpush1.msra.mxu0 %v51
    %2122 = vmatprep.subr.mxu0 0.0
    %2123 = vmatpush1.msra.mxu0 %v50
    %2124 = vmatprep.subr.mxu0 0.0
    %2125 = vmatpush2.msra.mxu0 0.0
    %2126 = vmatprep.subr.mxu0 0.0
    %2127 = vmatpush2.msra.mxu0 0.0
    %2128 = vmatprep.subr.mxu0 0.0
    %2129 = vmatpush2.msra.mxu0 0.0
    %2130 = vmatprep.subr.mxu0 0.0
    %2131 = vmatpush2.msra.mxu0 0.0
    %2132 = vmatprep.subr.mxu0 0.0
    %2133 = vmatpush2.msra.mxu0 0.0
    %2134 = vmatprep.subr.mxu0 0.0
    %2135 = vmatpush2.msra.mxu0 0.0
    %2136 = vmatprep.subr.mxu0 0.0
    %2137 = vmatpush2.msra.mxu0 0.0
    %2138 = vmatprep.subr.mxu0 0.0
    %2139 = vmatpush2.msra.mxu0 0.0
    %2140 = vmatprep.subr.mxu0 0.0
    %2141 = vmatpush2.msra.mxu0 0.0
    %2142 = vmatprep.subr.mxu0 0.0
    %2143 = vmatpush2.msra.mxu0 0.0
    %2144 = vmatprep.subr.mxu0 0.0
    %2145 = vmatpush2.msra.mxu0 0.0
    %2146 = vmatprep.subr.mxu0 0.0
    %2147 = vmatpush2.msra.mxu0 0.0
    %2148 = vmatprep.subr.mxu0 0.0
    %2149 = vmatpush2.msra.mxu0 0.0
    %2150 = vmatprep.subr.mxu0 0.0
    %2151 = vmatpush2.msra.mxu0 0.0
    %2152 = vmatprep.subr.mxu0 0.0
    %2153 = vmatpush2.msra.mxu0 0.0
    %2154 = vmatprep.subr.mxu0 0.0
    %2155 = vmatpush2.msra.mxu0 0.0
    %2156 = vmatprep.mubr.f32.mxu0 0.0
    %2157 = vmatmul.mubr.f32.gmra.mxu0 %v2087
    %v2158 = vpop.f32.mrf.mxu0
    %v2159 = vadd.f32 %v2085, %v2158
    %v2160 = vpop.f32.mrf.mxu0
    %2161 = vmatprep.mubr.f32.mxu0 0.0
    %2162 = vmatmul.mubr.f32.gmra.mxu0 %v2090
    %v2163 = vpop.f32.mrf.mxu0
    %v2164 = vadd.f32 %v2085, %v2163
    %v2165 = vpop.f32.mrf.mxu0
    %2166 = vdwg.mxu0
    %2167 = vst.msk [vmem:[%s2] sm:$0xff] %vm61, %v2159
    %2168 = vst.msk [vmem:[%s2 + $0x8] sm:$0xff] %vm61, %v2164
    %v2169 = vmul.f32 %v50, %v50
    %v2170 = vmul.f32 %v51, %v51
    %v2171 = vmul.f32 %v52, %v52
    %v2172 = vmul.f32 %v53, %v53
    %vm2173 = vcmask 64544
    %v2174 = vsel %vm2173, %v2169, 0.0
    %v2175 = vsel %vm2173, %v2170, 0.0
    %v2176 = vadd.f32 %v2174, %v2175
    %v2177 = vsel %vm2173, %v2171, 0.0
    %v2178 = vadd.f32 %v2176, %v2177
    %v2179 = vsel %vm2173, %v2172, 0.0
    %v2180 = vadd.f32 %v2178, %v2179
    %v2181 = vrot.slane %v2180, 4
    %v2182 = vadd.f32 %v2180, %v2181
    %v2183 = vrot.slane %v2182, 2
    %v2184 = vadd.f32 %v2182, %v2183
    %v2185 = vrot.slane %v2184, 1
    %v2186 = vadd.f32 %v2184, %v2185
    %v2187 = vmul.f32 %v1365, %v1365
    %2189 = vrot.lane.b32.xlu0 %v2187, 32
    %v2190 = vpop.permute.xlu0 %2189
    %v2192 = vsel %vm1370, %v2190, 0.0
    %2193 = vadd.xlane.f32.xlu0 %v2192
    %v2194 = vpop.xlane.xlu0 %2193
    %2199 = vrot.lane.b32.xlu0 %v50, 124
    %v2200 = vpop.permute.xlu0 %2199
    %2201 = vrot.lane.b32.xlu0 %v51, 124
    %v2202 = vpop.permute.xlu0 %2201
    %2203 = vrot.lane.b32.xlu0 %v52, 124
    %v2204 = vpop.permute.xlu0 %2203
    %2205 = vrot.lane.b32.xlu0 %v53, 124
    %v2206 = vpop.permute.xlu0 %2205
    %2211 = vmatprep.subr.mxu0 0.0
    %2212 = vmatpush1.msra.mxu0 0.0
    %2213 = vmatprep.subr.mxu0 0.0
    %2214 = vmatpush1.msra.mxu0 0.0
    %2215 = vmatprep.subr.mxu0 0.0
    %2216 = vmatpush1.msra.mxu0 0.0
    %2217 = vmatprep.subr.mxu0 0.0
    %2218 = vmatpush1.msra.mxu0 0.0
    %2219 = vmatprep.subr.mxu0 0.0
    %2220 = vmatpush1.msra.mxu0 0.0
    %2221 = vmatprep.subr.mxu0 0.0
    %2222 = vmatpush1.msra.mxu0 0.0
    %2223 = vmatprep.subr.mxu0 0.0
    %2224 = vmatpush1.msra.mxu0 0.0
    %2225 = vmatprep.subr.mxu0 0.0
    %2226 = vmatpush1.msra.mxu0 0.0
    %2227 = vmatprep.subr.mxu0 0.0
    %2228 = vmatpush1.msra.mxu0 0.0
    %2229 = vmatprep.subr.mxu0 0.0
    %2230 = vmatpush1.msra.mxu0 0.0
    %2231 = vmatprep.subr.mxu0 0.0
    %2232 = vmatpush1.msra.mxu0 0.0
    %2233 = vmatprep.subr.mxu0 0.0
    %2234 = vmatpush1.msra.mxu0 0.0
    %2235 = vmatprep.subr.mxu0 0.0
    %2236 = vmatpush1.msra.mxu0 %v2206
    %2237 = vmatprep.subr.mxu0 0.0
    %2238 = vmatpush1.msra.mxu0 %v2204
    %2239 = vmatprep.subr.mxu0 0.0
    %2240 = vmatpush1.msra.mxu0 %v2202
    %2241 = vmatprep.subr.mxu0 0.0
    %2242 = vmatpush1.msra.mxu0 %v2200
    %2243 = vmatprep.subr.mxu0 0.0
    %2244 = vmatpush2.msra.mxu0 0.0
    %2245 = vmatprep.subr.mxu0 0.0
    %2246 = vmatpush2.msra.mxu0 0.0
    %2247 = vmatprep.subr.mxu0 0.0
    %2248 = vmatpush2.msra.mxu0 0.0
    %2249 = vmatprep.subr.mxu0 0.0
    %2250 = vmatpush2.msra.mxu0 0.0
    %2251 = vmatprep.subr.mxu0 0.0
    %2252 = vmatpush2.msra.mxu0 0.0
    %2253 = vmatprep.subr.mxu0 0.0
    %2254 = vmatpush2.msra.mxu0 0.0
    %2255 = vmatprep.subr.mxu0 0.0
    %2256 = vmatpush2.msra.mxu0 0.0
    %2257 = vmatprep.subr.mxu0 0.0
    %2258 = vmatpush2.msra.mxu0 0.0
    %2259 = vmatprep.subr.mxu0 0.0
    %2260 = vmatpush2.msra.mxu0 0.0
    %2261 = vmatprep.subr.mxu0 0.0
    %2262 = vmatpush2.msra.mxu0 0.0
    %2263 = vmatprep.subr.mxu0 0.0
    %2264 = vmatpush2.msra.mxu0 0.0
    %2265 = vmatprep.subr.mxu0 0.0
    %2266 = vmatpush2.msra.mxu0 0.0
    %2267 = vmatprep.subr.mxu0 0.0
    %2268 = vmatpush2.msra.mxu0 0.0
    %2269 = vmatprep.subr.mxu0 0.0
    %2270 = vmatpush2.msra.mxu0 0.0
    %2271 = vmatprep.subr.mxu0 0.0
    %2272 = vmatpush2.msra.mxu0 0.0
    %2273 = vmatprep.subr.mxu0 0.0
    %2274 = vmatpush2.msra.mxu0 0.0
    %2275 = vmatprep.mubr.f32.mxu0 0.0
    %2276 = vmatmul.mubr.f32.gmra.mxu0 %v1380
    %v2277 = vpop.f32.mrf.mxu0
    %v2278 = vadd.f32 0.0, %v2277
    %v2279 = vpop.f32.mrf.mxu0
    %2280 = vdwg.mxu0
    %v2281 = vmul.f32 %v2278, 2.0
    %v2282 = vsub.f32 %v2194, %v2281
    %2284 = vrot.lane.b32.xlu0 %v2186, 124
    %v2285 = vpop.permute.xlu0 %2284
    %v2287 = vadd.f32 %v2282, %v2285
    %v2288 = vmax.f32 %v2287, 0.0
    %v2289 = vsub.f32 0.0, %v2288
    %v2290 = vmul.f32 %v2289, 1.442695
    %v2291 = vpow.pop %v2290
    %vm2292 = vcmask 25600
    %2293 = vst.msk [vmem:[#allocation7] sm:$0x3] %vm2292, %v2291
    // Predicated region
    $region14: #{lstmed_forward.1} parent=1 // pred_check
      _
    $region15: #{lstmed_forward.1} parent=1 // pred_check_branch
      %2295 = sbr.rel (0) target = $region17
    $region16: #{lstmed_forward.1} parent=1 // pred_region
      _
    $region17: #{lstmed_forward.1} parent=1 // pred_fallthru
      _
    // Predicated region
    $region18: #{lstmed_forward.1} parent=1 // pred_check
      _
    $region19: #{lstmed_forward.1} parent=1 // pred_check_branch
      %2297 = sbr.rel (0) target = $region21
    $region20: #{lstmed_forward.1} parent=1 // pred_region
      %s2299 = ssub.s32 32, 32
      %2300 = vsyncadd [#allocation5], %s2299
      %s2302 = sshll.u32 [#allocation6], 4
      %s2303 = int_to_ptr.vmem [resolvable:$true] %s2302
      %2305 = dma.vmem_to_hbm [thread:$0]  %s2303, 32, %s3, [#allocation5]
    $region21: #{lstmed_forward.1} parent=1 // pred_fallthru
      _
    // Predicated region
    $region22: #{lstmed_forward.1} parent=1 // pred_check
      _
    $region23: #{lstmed_forward.1} parent=1 // pred_check_branch
      %2307 = sbr.rel (0) target = $region25
    $region24: #{lstmed_forward.1} parent=1 // pred_region
      %s2309 = ssub.s32 32, 32
      %2310 = vsyncadd [#allocation8], %s2309
      %s2312 = sshll.u32 [#allocation7], 4
      %s2313 = int_to_ptr.vmem [resolvable:$true] %s2312
      %2315 = dma.vmem_to_hbm [thread:$0]  %s2313, 32, %s4, [#allocation8]
    $region25: #{lstmed_forward.1} parent=1 // pred_fallthru
      _
    // Predicated region
    $region26: #{lstmed_forward.1} parent=1 // pred_check
      _
    $region27: #{lstmed_forward.1} parent=1 // pred_check_branch
      %2317 = sbr.rel (0) target = $region29
    $region28: #{lstmed_forward.1} parent=1 // pred_region
      _
    $region29: #{lstmed_forward.1} parent=1 // pred_fallthru
      _
    // Predicated region
    $region30: #{lstmed_forward.1} parent=1 // pred_check
      _
    $region31: #{lstmed_forward.1} parent=1 // pred_check_branch
      %2319 = sbr.rel (0) target = $region33
    $region32: #{lstmed_forward.1} parent=1 // pred_region
      %2320 = dma.done [#allocation5], 32
    $region33: #{lstmed_forward.1} parent=1 // pred_fallthru
      _
    // Predicated region
    $region34: #{lstmed_forward.1} parent=1 // pred_check
      _
    $region35: #{lstmed_forward.1} parent=1 // pred_check_branch
      %2322 = sbr.rel (0) target = $region37
    $region36: #{lstmed_forward.1} parent=1 // pred_region
      %2323 = dma.done [#allocation8], 32
    $region37: #{lstmed_forward.1} parent=1 // pred_fallthru
      _
    %2324 = vsyncpa [#allocation4], 1
    %2325 = vsyncpa [#allocation5], 1
    %2326 = vsyncpa [#allocation8], 1

</llo_original>
